<compile_context>
chip_gen: v6e
topology: v6e:2x2x1
jax: 0.10.0
libtpu: 0.0.40
codegen_flags: <defaults>
</compile_context>

<pallas_src>
import jax
import jax.numpy as jnp
from jax.experimental import pallas as pl
from jax.experimental.pallas import tpu as pltpu


# ----------------------------------------------------------------------------
# Kernel: one batch tile through the whole fused 4-layer MLP.
# ----------------------------------------------------------------------------
def _discriminator_kernel(z_ref,
                          w1_ref, b1_ref,
                          w2_ref, b2_ref,
                          w3_ref, b3_ref,
                          w4_ref, b4_ref,
                          o_ref):
    bf16, f32 = jnp.bfloat16, jnp.float32

    # layer 1: Linear(A -> 1024) + ReLU   (bf16 x bf16 -> f32 MXU matmul, K=32)
    h = jnp.dot(z_ref[...].astype(bf16), w1_ref[...], preferred_element_type=f32)
    h = jnp.maximum(h + b1_ref[...], 0.0)

    # layer 2: Linear(1024 -> 512) + ReLU
    h = jnp.dot(h.astype(bf16), w2_ref[...], preferred_element_type=f32)
    h = jnp.maximum(h + b2_ref[...], 0.0)

    # layer 3: Linear(512 -> 256) + ReLU
    h = jnp.dot(h.astype(bf16), w3_ref[...], preferred_element_type=f32)
    h = jnp.maximum(h + b3_ref[...], 0.0)

    # layer 4: Linear(256 -> 1) + Sigmoid, computed directly in transposed
    # orientation: (1, 256) . (tm, 256)^T -> (1, tm).  Output tile is
    # lane-dense (tm lanes, 1 sublane) -> unmasked full-lane stores, and the
    # wrapper only reshapes (no broadcast, no slice of a padded lane dim).
    logit_t = jax.lax.dot_general(
        w4_ref[...], h.astype(bf16),
        dimension_numbers=(((1,), (1,)), ((), ())),
        preferred_element_type=f32)                      # (1, tm) f32
    o_ref[...] = jax.nn.sigmoid(logit_t + b4_ref[0]).astype(o_ref.dtype)


# ----------------------------------------------------------------------------
# One-time parameter preparation (hoisted out of the per-call path).
# ----------------------------------------------------------------------------
def prepare_discriminator_params(params):
    """Cast/reshape params once: bf16 (in,out) weights, f32 (1,out) biases,
    w4 as a (1, 256) bf16 row, b4 as a (1,) f32 SMEM scalar."""
    return {
        "w1": params["w1"].astype(jnp.bfloat16),
        "w2": params["w2"].astype(jnp.bfloat16),
        "w3": params["w3"].astype(jnp.bfloat16),
        "w4": params["w4"].reshape(1, -1).astype(jnp.bfloat16),
        "b1": params["b1"].reshape(1, -1).astype(jnp.float32),
        "b2": params["b2"].reshape(1, -1).astype(jnp.float32),
        "b3": params["b3"].reshape(1, -1).astype(jnp.float32),
        "b4": params["b4"].reshape(-1).astype(jnp.float32),
    }


def _round_up(x, m):
    return ((x + m - 1) // m) * m


def _auto_tm(batch):
    if batch <= 64:
        return max(8, _round_up(batch, 8))   # no padded-M MXU work for tiny B
    if batch <= 128:
        return 128
    if batch <= 512:
        return 256                            # fills 256-row MXU on v6e/v7x
    return 512                                # amortize per-grid-step overhead


# ----------------------------------------------------------------------------
# Wrapper: BlockSpecs / grid.  Expects *prepared* params.
# ----------------------------------------------------------------------------
def discriminator_forward(z, prep, *, tm=None):
    """z: [B, A] float32.  prep: output of prepare_discriminator_params."""
    B, A = z.shape
    if tm is None:
        tm = _auto_tm(B)

    n_tiles = pl.cdiv(B, tm)
    b_pad = n_tiles * tm

    z_p = z.astype(jnp.float32)
    if b_pad != B:
        z_p = jnp.pad(z_p, ((0, b_pad - B), (0, 0)))

    w1, w2, w3, w4 = prep["w1"], prep["w2"], prep["w3"], prep["w4"]
    b1, b2, b3, b4 = prep["b1"], prep["b2"], prep["b3"], prep["b4"]
    d1, d2, d3 = w1.shape[1], w2.shape[1], w3.shape[1]

    def resident(shape):
        # Constant index_map -> fetched once, VMEM-resident for every grid step.
        # TODO(synk): pipeline_mode=pl.Buffered(1) would drop the second buffer
        # copy; omitted since the ~3 MiB footprint is already trivial everywhere.
        return pl.BlockSpec(shape, lambda i: (0, 0))

    out_t = pl.pallas_call(
        _discriminator_kernel,
        out_shape=jax.ShapeDtypeStruct((1, b_pad), jnp.float32),
        grid=(n_tiles,),
        in_specs=[
            pl.BlockSpec((tm, A), lambda i: (i, 0)),            # z tile (pipelined)
            resident((A, d1)), resident((1, d1)),               # w1, b1
            resident((d1, d2)), resident((1, d2)),              # w2, b2
            resident((d2, d3)), resident((1, d3)),              # w3, b3
            resident((1, d3)),                                  # w4 row
            pl.BlockSpec(memory_space=pltpu.MemorySpace.SMEM),  # b4 scalar
        ],
        out_specs=pl.BlockSpec((1, tm), lambda i: (0, i)),      # transposed, lane-dense
        compiler_params=pltpu.CompilerParams(
            dimension_semantics=("parallel",),   # v7x: shard batch tiles over 2 TCs
            vmem_limit_bytes=32 << 20,           # covers (512,1024) f32 intermediates
        ),
    )(z_p, w1, b1, w2, b2, w3, b3, w4, b4)

    return out_t[0, :B].reshape(B, 1)


# ----------------------------------------------------------------------------
# Deterministic init replicating kaiming_normal (fan_in, relu gain) on PyTorch
# Linear weights (out, in); stored transposed as (in, out).  Biases = 0.
# ----------------------------------------------------------------------------
def init_discriminator_params(key, num_ans_candidates, num_hid):
    dims = [(num_ans_candidates, 1024),
            (num_hid, num_hid // 2),
            (num_hid // 2, num_hid // 4),
            (num_hid // 4, 1)]
    params = {}
    for i, (fan_in, fan_out) in enumerate(dims, start=1):
        key, sub = jax.random.split(key)
        std = (2.0 / fan_in) ** 0.5  # kaiming_normal, mode='fan_in', a=0
        params[f"w{i}"] = std * jax.random.normal(sub, (fan_in, fan_out), jnp.float32)
        params[f"b{i}"] = jnp.zeros((1, fan_out), jnp.float32)
    return params


# Pure-JAX references.
def _reference_forward(z, p):
    h = jax.nn.relu(z @ p["w1"] + p["b1"])
    h = jax.nn.relu(h @ p["w2"] + p["b2"])
    h = jax.nn.relu(h @ p["w3"] + p["b3"])
    return jax.nn.sigmoid(h @ p["w4"] + p["b4"])


def _reference_forward_bf16(z, p):
    bf, f32 = jnp.bfloat16, jnp.float32
    h = jax.nn.relu(jnp.dot(z.astype(bf), p["w1"].astype(bf),
                            preferred_element_type=f32) + p["b1"])
    h = jax.nn.relu(jnp.dot(h.astype(bf), p["w2"].astype(bf),
                            preferred_element_type=f32) + p["b2"])
    h = jax.nn.relu(jnp.dot(h.astype(bf), p["w3"].astype(bf),
                            preferred_element_type=f32) + p["b3"])
    logit = jnp.dot(h.astype(bf), p["w4"].astype(bf),
                    preferred_element_type=f32) + p["b4"]
    return jax.nn.sigmoid(logit)


if __name__ == "__main__":
    key = jax.random.PRNGKey(0)
    batch = 8
    num_ans_candidates = 32
    num_hid = 1024  # the PyTorch module's layer shapes only chain for 1024

    k_param, k_data = jax.random.split(key)
    params = init_discriminator_params(k_param, num_ans_candidates, num_hid)
    prep = prepare_discriminator_params(params)   # one-time weight prep (hoisted)
    z = jax.random.normal(k_data, (batch, num_ans_candidates), jnp.float32)

    out = jax.block_until_ready(discriminator_forward(z, prep))
    assert out.shape == (batch, 1)

    ref_bf16 = _reference_forward_bf16(z, params)
    ref_f32 = _reference_forward(z, params)
    assert jnp.allclose(out, ref_bf16, atol=5e-3, rtol=5e-3), \
        f"max |diff| vs bf16 ref = {float(jnp.max(jnp.abs(out - ref_bf16)))}"
    assert jnp.allclose(out, ref_f32, atol=5e-2, rtol=5e-2), \
        f"max |diff| vs f32 ref = {float(jnp.max(jnp.abs(out - ref_f32)))}"

    print("KERNEL_OK")
</pallas_src>

<mosaic_0001>
module attributes {stable_mosaic.version = 11 : i64} {
  func.func @_discriminator_kernel(%arg0: i32, %arg1: memref<8x32xf32, #tpu.memory_space<vmem>>, %arg2: memref<32x1024xbf16, #tpu.memory_space<vmem>>, %arg3: memref<1x1024xf32, #tpu.memory_space<vmem>>, %arg4: memref<1024x512xbf16, #tpu.memory_space<vmem>>, %arg5: memref<1x512xf32, #tpu.memory_space<vmem>>, %arg6: memref<512x256xbf16, #tpu.memory_space<vmem>>, %arg7: memref<1x256xf32, #tpu.memory_space<vmem>>, %arg8: memref<1x256xbf16, #tpu.memory_space<vmem>>, %arg9: memref<1xf32, #tpu.memory_space<smem>>, %arg10: memref<1x8xf32, #tpu.memory_space<vmem>>) attributes {dimension_semantics = [#tpu.dimension_semantics<parallel>], iteration_bounds = array<i64: 1>, scalar_prefetch = 0 : i64, scratch_operands = 0 : i64, tpu.core_type = #tpu.core_type<tc>, window_params = [{transform_indices = @transform_0, window_bounds = array<i64: 8, 32>}, {pipeline_mode = #tpu.pipeline_mode<synchronous>, transform_indices = @transform_1, window_bounds = array<i64: 32, 1024>}, {pipeline_mode = #tpu.pipeline_mode<synchronous>, transform_indices = @transform_2, window_bounds = array<i64: 1, 1024>}, {pipeline_mode = #tpu.pipeline_mode<synchronous>, transform_indices = @transform_3, window_bounds = array<i64: 1024, 512>}, {pipeline_mode = #tpu.pipeline_mode<synchronous>, transform_indices = @transform_4, window_bounds = array<i64: 1, 512>}, {pipeline_mode = #tpu.pipeline_mode<synchronous>, transform_indices = @transform_5, window_bounds = array<i64: 512, 256>}, {pipeline_mode = #tpu.pipeline_mode<synchronous>, transform_indices = @transform_6, window_bounds = array<i64: 1, 256>}, {pipeline_mode = #tpu.pipeline_mode<synchronous>, transform_indices = @transform_7, window_bounds = array<i64: 1, 256>}, {transform_indices = @transform_8, window_bounds = array<i64: 1>}, {transform_indices = @transform_9, window_bounds = array<i64: 1, 8>}]} {
    %c0 = arith.constant 0 : index
    %c0_0 = arith.constant 0 : index
    %0 = vector.load %arg1[%c0, %c0_0] : memref<8x32xf32, #tpu.memory_space<vmem>>, vector<8x32xf32>
    %1 = arith.truncf %0 : vector<8x32xf32> to vector<8x32xbf16>
    %c0_1 = arith.constant 0 : index
    %c0_2 = arith.constant 0 : index
    %2 = vector.load %arg2[%c0_1, %c0_2] : memref<32x1024xbf16, #tpu.memory_space<vmem>>, vector<32x1024xbf16>
    %cst = arith.constant dense<0.000000e+00> : vector<8x1024xf32>
    %3 = tpu.matmul %1, %2, %cst {dimension_numbers = #tpu.dot_dimension_numbers<[1], [0], [0], [1], [0, 0, 1, 1], [], []>} : vector<8x32xbf16>, vector<32x1024xbf16>, vector<8x1024xf32> -> vector<8x1024xf32>
    %c0_3 = arith.constant 0 : index
    %c0_4 = arith.constant 0 : index
    %4 = vector.load %arg3[%c0_3, %c0_4] : memref<1x1024xf32, #tpu.memory_space<vmem>>, vector<1x1024xf32>
    %5 = vector.broadcast %4 : vector<1x1024xf32> to vector<8x1024xf32>
    %6 = arith.addf %3, %5 : vector<8x1024xf32>
    %cst_5 = arith.constant 0.000000e+00 : f32
    %7 = vector.broadcast %cst_5 : f32 to vector<8x1024xf32>
    %8 = arith.maximumf %6, %7 : vector<8x1024xf32>
    %9 = arith.truncf %8 : vector<8x1024xf32> to vector<8x1024xbf16>
    %c0_6 = arith.constant 0 : index
    %c0_7 = arith.constant 0 : index
    %10 = vector.load %arg4[%c0_6, %c0_7] : memref<1024x512xbf16, #tpu.memory_space<vmem>>, vector<1024x512xbf16>
    %cst_8 = arith.constant dense<0.000000e+00> : vector<8x512xf32>
    %11 = tpu.matmul %9, %10, %cst_8 {dimension_numbers = #tpu.dot_dimension_numbers<[1], [0], [0], [1], [0, 0, 1, 1], [], []>} : vector<8x1024xbf16>, vector<1024x512xbf16>, vector<8x512xf32> -> vector<8x512xf32>
    %c0_9 = arith.constant 0 : index
    %c0_10 = arith.constant 0 : index
    %12 = vector.load %arg5[%c0_9, %c0_10] : memref<1x512xf32, #tpu.memory_space<vmem>>, vector<1x512xf32>
    %13 = vector.broadcast %12 : vector<1x512xf32> to vector<8x512xf32>
    %14 = arith.addf %11, %13 : vector<8x512xf32>
    %cst_11 = arith.constant 0.000000e+00 : f32
    %15 = vector.broadcast %cst_11 : f32 to vector<8x512xf32>
    %16 = arith.maximumf %14, %15 : vector<8x512xf32>
    %17 = arith.truncf %16 : vector<8x512xf32> to vector<8x512xbf16>
    %c0_12 = arith.constant 0 : index
    %c0_13 = arith.constant 0 : index
    %18 = vector.load %arg6[%c0_12, %c0_13] : memref<512x256xbf16, #tpu.memory_space<vmem>>, vector<512x256xbf16>
    %cst_14 = arith.constant dense<0.000000e+00> : vector<8x256xf32>
    %19 = tpu.matmul %17, %18, %cst_14 {dimension_numbers = #tpu.dot_dimension_numbers<[1], [0], [0], [1], [0, 0, 1, 1], [], []>} : vector<8x512xbf16>, vector<512x256xbf16>, vector<8x256xf32> -> vector<8x256xf32>
    %c0_15 = arith.constant 0 : index
    %c0_16 = arith.constant 0 : index
    %20 = vector.load %arg7[%c0_15, %c0_16] : memref<1x256xf32, #tpu.memory_space<vmem>>, vector<1x256xf32>
    %21 = vector.broadcast %20 : vector<1x256xf32> to vector<8x256xf32>
    %22 = arith.addf %19, %21 : vector<8x256xf32>
    %cst_17 = arith.constant 0.000000e+00 : f32
    %23 = vector.broadcast %cst_17 : f32 to vector<8x256xf32>
    %24 = arith.maximumf %22, %23 : vector<8x256xf32>
    %c0_18 = arith.constant 0 : index
    %c0_19 = arith.constant 0 : index
    %25 = vector.load %arg8[%c0_18, %c0_19] : memref<1x256xbf16, #tpu.memory_space<vmem>>, vector<1x256xbf16>
    %26 = arith.truncf %24 : vector<8x256xf32> to vector<8x256xbf16>
    %cst_20 = arith.constant dense<0.000000e+00> : vector<1x8xf32>
    %27 = tpu.matmul %25, %26, %cst_20 {dimension_numbers = #tpu.dot_dimension_numbers<[1], [1], [0], [0], [0, 0, 1, 0], [], []>} : vector<1x256xbf16>, vector<8x256xbf16>, vector<1x8xf32> -> vector<1x8xf32>
    %c0_21 = arith.constant 0 : index
    %28 = memref.load %arg9[%c0_21] : memref<1xf32, #tpu.memory_space<smem>>
    %29 = vector.broadcast %28 : f32 to vector<1x8xf32>
    %30 = arith.addf %27, %29 : vector<1x8xf32>
    %31 = arith.negf %30 : vector<1x8xf32>
    %32 = math.exp %31 : vector<1x8xf32>
    %cst_22 = arith.constant 1.000000e+00 : f32
    %33 = vector.broadcast %cst_22 : f32 to vector<1x8xf32>
    %34 = arith.addf %33, %32 : vector<1x8xf32>
    %35 = arith.divf %33, %34 : vector<1x8xf32>
    %c0_23 = arith.constant 0 : index
    %c0_24 = arith.constant 0 : index
    %36 = vector.load %arg10[%c0_23, %c0_24] : memref<1x8xf32, #tpu.memory_space<vmem>>, vector<1x8xf32>
    tpu.vector_store %arg10[%c0_23, %c0_24], %35 {strides = array<i32>} : memref<1x8xf32, #tpu.memory_space<vmem>>, vector<1x8xf32>,
    return
  }
  func.func @transform_0(%arg0: i32) -> (i32, i32) {
    %c0_i32 = arith.constant 0 : i32
    %c0_i32_0 = arith.constant 0 : i32
    return %arg0, %c0_i32 : i32, i32
  }
  func.func @transform_1(%arg0: i32) -> (i32, i32) {
    %c0_i32 = arith.constant 0 : i32
    %c0_i32_0 = arith.constant 0 : i32
    %c0_i32_1 = arith.constant 0 : i32
    return %c0_i32, %c0_i32_0 : i32, i32
  }
  func.func @transform_2(%arg0: i32) -> (i32, i32) {
    %c0_i32 = arith.constant 0 : i32
    %c0_i32_0 = arith.constant 0 : i32
    %c0_i32_1 = arith.constant 0 : i32
    return %c0_i32, %c0_i32_0 : i32, i32
  }
  func.func @transform_3(%arg0: i32) -> (i32, i32) {
    %c0_i32 = arith.constant 0 : i32
    %c0_i32_0 = arith.constant 0 : i32
    %c0_i32_1 = arith.constant 0 : i32
    return %c0_i32, %c0_i32_0 : i32, i32
  }
  func.func @transform_4(%arg0: i32) -> (i32, i32) {
    %c0_i32 = arith.constant 0 : i32
    %c0_i32_0 = arith.constant 0 : i32
    %c0_i32_1 = arith.constant 0 : i32
    return %c0_i32, %c0_i32_0 : i32, i32
  }
  func.func @transform_5(%arg0: i32) -> (i32, i32) {
    %c0_i32 = arith.constant 0 : i32
    %c0_i32_0 = arith.constant 0 : i32
    %c0_i32_1 = arith.constant 0 : i32
    return %c0_i32, %c0_i32_0 : i32, i32
  }
  func.func @transform_6(%arg0: i32) -> (i32, i32) {
    %c0_i32 = arith.constant 0 : i32
    %c0_i32_0 = arith.constant 0 : i32
    %c0_i32_1 = arith.constant 0 : i32
    return %c0_i32, %c0_i32_0 : i32, i32
  }
  func.func @transform_7(%arg0: i32) -> (i32, i32) {
    %c0_i32 = arith.constant 0 : i32
    %c0_i32_0 = arith.constant 0 : i32
    %c0_i32_1 = arith.constant 0 : i32
    return %c0_i32, %c0_i32_0 : i32, i32
  }
  func.func @transform_8(%arg0: i32) -> i32 {
    %c0_i32 = arith.constant 0 : i32
    %c0_i32_0 = arith.constant 0 : i32
    return %c0_i32 : i32
  }
  func.func @transform_9(%arg0: i32) -> (i32, i32) {
    %c0_i32 = arith.constant 0 : i32
    %c0_i32_0 = arith.constant 0 : i32
    return %c0_i32, %arg0 : i32, i32
  }
}

</mosaic_0001>

<llo_original>
// kernel: tpu_custom_call.1
$region0: #{tpu_custom_call.1}
  #allocation0 [shape = 'u32[]', space=smem, size = 0x4, offset = 0x4, fixed_abs, tag = 'smem constant byte address 0x4 - core index']
  #allocation1 [shape = 'u32[144,128]{1,0:T(1,128)}', space=vmem, size = 0x12000, scoped, tag = 'internal scratch']
  #allocation2 [shape = 'f32[1]{0:T(128)S(6)}', space=smem, size = 0x200, scoped, tag = 'scoped memory for tpu_custom_call.1']
  %s0 = inlined_call_operand.hbm [shape: f32[8,32], index: 0, kind: input, shape index: {}]
  %s1 = inlined_call_operand.hbm [shape: bf16[32,1024], index: 1, kind: input, shape index: {}]
  %s2 = inlined_call_operand.hbm [shape: f32[1,1024], index: 2, kind: input, shape index: {}]
  %s3 = inlined_call_operand.hbm [shape: bf16[1024,512], index: 3, kind: input, shape index: {}]
  %s4 = inlined_call_operand.vmem [shape: f32[1,512], index: 4, kind: input, shape index: {}]
  %s5 = inlined_call_operand.hbm [shape: bf16[512,256], index: 5, kind: input, shape index: {}]
  %s6 = inlined_call_operand.vmem [shape: f32[1,256], index: 6, kind: input, shape index: {}]
  %s7 = inlined_call_operand.vmem [shape: bf16[1,256], index: 7, kind: input, shape index: {}]
  %s8 = inlined_call_operand.<no memory space> [shape: f32[1], index: 8, kind: input, shape index: {}]
  %s9 = inlined_call_operand.hbm [shape: f32[1,8], index: 9, kind: output, shape index: {}]
  %s10 = sld [smem:[#allocation0]]
  $region66: #{tpu_custom_call.1} parent=0
    _
  %s12 = ssub.s32 1, %s10
  %s13 = scalar_select 0, %s12, %s10
  %14 = sst [smem:[#allocation2]] %s8
  $region1: #{tpu_custom_call.1} parent=0
    #allocation3 [shape = 'u8[4096]{0}', space=vmem, size = 0x1000, scoped, tag = 'input window, operand 0, single buffered']
    #allocation4 [shape = 's32[1]{0}', space=sflag, size = 0x4, scoped, tag = 'scoped memory for tpu_custom_call.1']
    #allocation5 [shape = 's32[1]{0}', space=sflag, size = 0x4, scoped, tag = 'scoped memory for tpu_custom_call.1']
    #allocation6 [shape = 'u8[65536]{0}', space=vmem, size = 0x10000, scoped, tag = 'input window, operand 1, single buffered']
    #allocation7 [shape = 's32[1]{0}', space=sflag, size = 0x4, scoped, tag = 'scoped memory for tpu_custom_call.1']
    #allocation8 [shape = 'u8[4096]{0}', space=vmem, size = 0x1000, scoped, tag = 'input window, operand 2, single buffered']
    #allocation9 [shape = 'u8[1048576]{0}', space=vmem, size = 0x100000, scoped, tag = 'input window, operand 3, single buffered']
    #allocation10 [shape = 's32[1]{0}', space=sflag, size = 0x4, scoped, tag = 'scoped memory for tpu_custom_call.1']
    #allocation11 [shape = 'u8[262144]{0}', space=vmem, size = 0x40000, scoped, tag = 'input window, operand 5, single buffered']
    #allocation12 [shape = 'u8[512]{0}', space=vmem, size = 0x400, scoped, tag = 'output window, operand 0, single buffered']
    %15 = vsyncpa [#allocation4], 0
    %16 = vsyncpa [#allocation7], 0
    %17 = vsyncpa [#allocation10], 0
    %18 = vsyncpa [#allocation5], 0
    // Predicated region
    $region2: #{tpu_custom_call.1} parent=1 // pred_check
      _
    $region3: #{tpu_custom_call.1} parent=1 // pred_check_branch
      %20 = sbr.rel (0) target = $region5
    $region4: #{tpu_custom_call.1} parent=1 // pred_region
      %s22 = ssub.s32 128, 128
      %23 = vsyncadd [#allocation4], %s22
      %s25 = sshll.u32 [#allocation3], 4
      %s26 = int_to_ptr.vmem [resolvable:$true] %s25
      %28 = dma.hbm_to_vmem [thread:$0]  %s0, 128, %s26, [#allocation4]
    $region5: #{tpu_custom_call.1} parent=1 // pred_fallthru
      _
    // Predicated region
    $region6: #{tpu_custom_call.1} parent=1 // pred_check
      _
    $region7: #{tpu_custom_call.1} parent=1 // pred_check_branch
      %30 = sbr.rel (0) target = $region9
    $region8: #{tpu_custom_call.1} parent=1 // pred_region
      %s32 = ssub.s32 2048, 2048
      %33 = vsyncadd [#allocation7], %s32
      %s34 = sshll.u32 [#allocation6], 4
      %s35 = int_to_ptr.vmem [resolvable:$true] %s34
      %40 = dma.hbm_to_vmem [thread:$0]  %s1, 2048, %s35, [#allocation7], 512, 512, 32
    $region9: #{tpu_custom_call.1} parent=1 // pred_fallthru
      _
    // Predicated region
    $region10: #{tpu_custom_call.1} parent=1 // pred_check
      _
    $region11: #{tpu_custom_call.1} parent=1 // pred_check_branch
      %42 = sbr.rel (0) target = $region13
    $region12: #{tpu_custom_call.1} parent=1 // pred_region
      %s44 = ssub.s32 128, 128
      %45 = vsyncadd [#allocation7], %s44
      %s47 = sshll.u32 [#allocation8], 4
      %s48 = int_to_ptr.vmem [resolvable:$true] %s47
      %50 = dma.hbm_to_vmem [thread:$0]  %s2, 128, %s48, [#allocation7]
    $region13: #{tpu_custom_call.1} parent=1 // pred_fallthru
      _
    // Predicated region
    $region14: #{tpu_custom_call.1} parent=1 // pred_check
      _
    $region15: #{tpu_custom_call.1} parent=1 // pred_check_branch
      %52 = sbr.rel (0) target = $region17
    $region16: #{tpu_custom_call.1} parent=1 // pred_region
      %s54 = ssub.s32 32768, 32768
      %55 = vsyncadd [#allocation10], %s54
      %s56 = sshll.u32 [#allocation9], 4
      %s57 = int_to_ptr.vmem [resolvable:$true] %s56
      %62 = dma.hbm_to_vmem [thread:$0]  %s3, 32768, %s57, [#allocation10], 256, 256, 16
    $region17: #{tpu_custom_call.1} parent=1 // pred_fallthru
      _
    // Predicated region
    $region18: #{tpu_custom_call.1} parent=1 // pred_check
      _
    $region19: #{tpu_custom_call.1} parent=1 // pred_check_branch
      %64 = sbr.rel (0) target = $region21
    $region20: #{tpu_custom_call.1} parent=1 // pred_region
      _
    $region21: #{tpu_custom_call.1} parent=1 // pred_fallthru
      _
    // Predicated region
    $region22: #{tpu_custom_call.1} parent=1 // pred_check
      _
    $region23: #{tpu_custom_call.1} parent=1 // pred_check_branch
      %66 = sbr.rel (0) target = $region25
    $region24: #{tpu_custom_call.1} parent=1 // pred_region
      %s68 = ssub.s32 8192, 8192
      %69 = vsyncadd [#allocation10], %s68
      %s70 = sshll.u32 [#allocation11], 4
      %s71 = int_to_ptr.vmem [resolvable:$true] %s70
      %76 = dma.hbm_to_vmem [thread:$0]  %s5, 8192, %s71, [#allocation10], 128, 128, 8
    $region25: #{tpu_custom_call.1} parent=1 // pred_fallthru
      _
    // Predicated region
    $region26: #{tpu_custom_call.1} parent=1 // pred_check
      _
    $region27: #{tpu_custom_call.1} parent=1 // pred_check_branch
      %78 = sbr.rel (0) target = $region29
    $region28: #{tpu_custom_call.1} parent=1 // pred_region
      _
    $region29: #{tpu_custom_call.1} parent=1 // pred_fallthru
      _
    // Predicated region
    $region30: #{tpu_custom_call.1} parent=1 // pred_check
      _
    $region31: #{tpu_custom_call.1} parent=1 // pred_check_branch
      %80 = sbr.rel (0) target = $region33
    $region32: #{tpu_custom_call.1} parent=1 // pred_region
      _
    $region33: #{tpu_custom_call.1} parent=1 // pred_fallthru
      _
    // Predicated region
    $region34: #{tpu_custom_call.1} parent=1 // pred_check
      _
    $region35: #{tpu_custom_call.1} parent=1 // pred_check_branch
      %82 = sbr.rel (0) target = $region37
    $region36: #{tpu_custom_call.1} parent=1 // pred_region
      _
    $region37: #{tpu_custom_call.1} parent=1 // pred_fallthru
      _
    // Predicated region
    $region38: #{tpu_custom_call.1} parent=1 // pred_check
      _
    $region39: #{tpu_custom_call.1} parent=1 // pred_check_branch
      %84 = sbr.rel (0) target = $region41
    $region40: #{tpu_custom_call.1} parent=1 // pred_region
      %85 = dma.done [#allocation4], 128
    $region41: #{tpu_custom_call.1} parent=1 // pred_fallthru
      _
    // Predicated region
    $region42: #{tpu_custom_call.1} parent=1 // pred_check
      _
    $region43: #{tpu_custom_call.1} parent=1 // pred_check_branch
      %87 = sbr.rel (0) target = $region45
    $region44: #{tpu_custom_call.1} parent=1 // pred_region
      %88 = dma.done [#allocation7], 2048
    $region45: #{tpu_custom_call.1} parent=1 // pred_fallthru
      _
    // Predicated region
    $region46: #{tpu_custom_call.1} parent=1 // pred_check
      _
    $region47: #{tpu_custom_call.1} parent=1 // pred_check_branch
      %90 = sbr.rel (0) target = $region49
    $region48: #{tpu_custom_call.1} parent=1 // pred_region
      %91 = dma.done [#allocation7], 128
    $region49: #{tpu_custom_call.1} parent=1 // pred_fallthru
      _
    // Predicated region
    $region50: #{tpu_custom_call.1} parent=1 // pred_check
      _
    $region51: #{tpu_custom_call.1} parent=1 // pred_check_branch
      %93 = sbr.rel (0) target = $region53
    $region52: #{tpu_custom_call.1} parent=1 // pred_region
      %94 = dma.done [#allocation10], 32768
    $region53: #{tpu_custom_call.1} parent=1 // pred_fallthru
      _
    // Predicated region
    $region54: #{tpu_custom_call.1} parent=1 // pred_check
      _
    $region55: #{tpu_custom_call.1} parent=1 // pred_check_branch
      %96 = sbr.rel (0) target = $region57
    $region56: #{tpu_custom_call.1} parent=1 // pred_region
      %97 = dma.done [#allocation10], 8192
    $region57: #{tpu_custom_call.1} parent=1 // pred_fallthru
      _
    %v99 = vld [vmem:[#allocation3] sm:$0xff]
    %v100 = vpack.c.bf16 %v99, %v99
    %v101 = vld [vmem:[#allocation6] sm:$0xff]
    %v102 = vld [vmem:[#allocation6 + $0x8] sm:$0xff]
    %v103 = vld [vmem:[#allocation6 + $0x10] sm:$0xff]
    %v104 = vld [vmem:[#allocation6 + $0x18] sm:$0xff]
    %v105 = vld [vmem:[#allocation6 + $0x20] sm:$0xff]
    %v106 = vld [vmem:[#allocation6 + $0x28] sm:$0xff]
    %v107 = vld [vmem:[#allocation6 + $0x30] sm:$0xff]
    %v108 = vld [vmem:[#allocation6 + $0x38] sm:$0xff]
    %v109 = vld [vmem:[#allocation6 + $0x40] sm:$0xff]
    %v110 = vld [vmem:[#allocation6 + $0x48] sm:$0xff]
    %v111 = vld [vmem:[#allocation6 + $0x50] sm:$0xff]
    %v112 = vld [vmem:[#allocation6 + $0x58] sm:$0xff]
    %v113 = vld [vmem:[#allocation6 + $0x60] sm:$0xff]
    %v114 = vld [vmem:[#allocation6 + $0x68] sm:$0xff]
    %v115 = vld [vmem:[#allocation6 + $0x70] sm:$0xff]
    %v116 = vld [vmem:[#allocation6 + $0x78] sm:$0xff]
    %v117 = vld [vmem:[#allocation8] sm:$0xff]
    %v119 = vlaneseq
    %v120 = vshrl.u32 %v119, 7
    %v121 = vsub.s32 0, %v120
    %v122 = vrot.slane %v117, %v121
    %v123 = vlaneseq
    %v124 = vshrl.u32 %v123, 7
    %v125 = vsub.s32 1, %v124
    %v126 = vrot.slane %v117, %v125
    %v127 = vlaneseq
    %v128 = vshrl.u32 %v127, 7
    %v129 = vsub.s32 2, %v128
    %v130 = vrot.slane %v117, %v129
    %v131 = vlaneseq
    %v132 = vshrl.u32 %v131, 7
    %v133 = vsub.s32 3, %v132
    %v134 = vrot.slane %v117, %v133
    %v135 = vlaneseq
    %v136 = vshrl.u32 %v135, 7
    %v137 = vsub.s32 4, %v136
    %v138 = vrot.slane %v117, %v137
    %v139 = vlaneseq
    %v140 = vshrl.u32 %v139, 7
    %v141 = vsub.s32 5, %v140
    %v142 = vrot.slane %v117, %v141
    %v143 = vlaneseq
    %v144 = vshrl.u32 %v143, 7
    %v145 = vsub.s32 6, %v144
    %v146 = vrot.slane %v117, %v145
    %v147 = vlaneseq
    %v148 = vshrl.u32 %v147, 7
    %v149 = vsub.s32 7, %v148
    %v150 = vrot.slane %v117, %v149
    %v175 = vunpack.c.l.b16 %v101
    %v176 = vunpack.c.h.b16 %v101
    %v177 = vunpack.c.l.b16 %v102
    %v178 = vunpack.c.h.b16 %v102
    %v179 = vunpack.c.l.b16 %v103
    %v180 = vunpack.c.h.b16 %v103
    %v181 = vunpack.c.l.b16 %v104
    %v182 = vunpack.c.h.b16 %v104
    %v183 = vunpack.c.l.b16 %v105
    %v184 = vunpack.c.h.b16 %v105
    %v185 = vunpack.c.l.b16 %v106
    %v186 = vunpack.c.h.b16 %v106
    %v187 = vunpack.c.l.b16 %v107
    %v188 = vunpack.c.h.b16 %v107
    %v189 = vunpack.c.l.b16 %v108
    %v190 = vunpack.c.h.b16 %v108
    %v191 = vunpack.c.l.b16 %v109
    %v192 = vunpack.c.h.b16 %v109
    %v193 = vunpack.c.l.b16 %v110
    %v194 = vunpack.c.h.b16 %v110
    %v195 = vunpack.c.l.b16 %v111
    %v196 = vunpack.c.h.b16 %v111
    %v197 = vunpack.c.l.b16 %v112
    %v198 = vunpack.c.h.b16 %v112
    %v199 = vunpack.c.l.b16 %v113
    %v200 = vunpack.c.h.b16 %v113
    %v201 = vunpack.c.l.b16 %v114
    %v202 = vunpack.c.h.b16 %v114
    %v203 = vunpack.c.l.b16 %v115
    %v204 = vunpack.c.h.b16 %v115
    %v205 = vunpack.c.l.b16 %v116
    %v206 = vunpack.c.h.b16 %v116
    %v207 = vpack.c.b16 %v183, %v175
    %v208 = vpack.c.b16 %v184, %v176
    %v209 = vpack.c.b16 %v185, %v177
    %v210 = vpack.c.b16 %v186, %v178
    %v211 = vpack.c.b16 %v187, %v179
    %v212 = vpack.c.b16 %v188, %v180
    %v213 = vpack.c.b16 %v189, %v181
    %v214 = vpack.c.b16 %v190, %v182
    %v215 = vpack.c.b16 %v199, %v191
    %v216 = vpack.c.b16 %v200, %v192
    %v217 = vpack.c.b16 %v201, %v193
    %v218 = vpack.c.b16 %v202, %v194
    %v219 = vpack.c.b16 %v203, %v195
    %v220 = vpack.c.b16 %v204, %v196
    %v221 = vpack.c.b16 %v205, %v197
    %v222 = vpack.c.b16 %v206, %v198
    %vm239 = vcmask 261120
    %v241 = vsel %vm239, %v100, 0
    %243 = vmatprep.subr.bf16.mxu0 0
    %244 = vmatpush1.bf16.msra.mxu0 0
    %245 = vmatprep.subr.bf16.mxu0 0
    %246 = vmatpush1.bf16.msra.mxu0 0
    %247 = vmatprep.subr.bf16.mxu0 0
    %248 = vmatpush1.bf16.msra.mxu0 0
    %249 = vmatprep.subr.bf16.mxu0 0
    %250 = vmatpush1.bf16.msra.mxu0 0
    %251 = vmatprep.subr.bf16.mxu0 0
    %252 = vmatpush1.bf16.msra.mxu0 0
    %253 = vmatprep.subr.bf16.mxu0 0
    %254 = vmatpush1.bf16.msra.mxu0 0
    %255 = vmatprep.subr.bf16.mxu0 %v216
    %256 = vmatpush1.bf16.msra.mxu0 %v215
    %257 = vmatprep.subr.bf16.mxu0 %v208
    %258 = vmatpush1.bf16.msra.mxu0 %v207
    %259 = vmatprep.subr.bf16.mxu0 0
    %260 = vmatpush2.bf16.msra.mxu0 0
    %261 = vmatprep.subr.bf16.mxu0 0
    %262 = vmatpush2.bf16.msra.mxu0 0
    %263 = vmatprep.subr.bf16.mxu0 0
    %264 = vmatpush2.bf16.msra.mxu0 0
    %265 = vmatprep.subr.bf16.mxu0 0
    %266 = vmatpush2.bf16.msra.mxu0 0
    %267 = vmatprep.subr.bf16.mxu0 0
    %268 = vmatpush2.bf16.msra.mxu0 0
    %269 = vmatprep.subr.bf16.mxu0 0
    %270 = vmatpush2.bf16.msra.mxu0 0
    %271 = vmatprep.subr.bf16.mxu0 0
    %272 = vmatpush2.bf16.msra.mxu0 0
    %273 = vmatprep.subr.bf16.mxu0 0
    %274 = vmatpush2.bf16.msra.mxu0 0
    %275 = vmatprep.mubr.bf16.mxu0 0
    %276 = vmatmul.mubr.bf16.gmra.mxu0 %v241
    %v277 = vpop.f32.mrf.mxu0
    %v278 = vadd.f32 %v122, %v277
    %v279 = vpop.f32.mrf.mxu0
    %v280 = vadd.f32 %v126, %v279
    %v281 = vpop.f32.mrf.mxu0
    %v282 = vpop.f32.mrf.mxu0
    %283 = vdwg.mxu0
    %284 = vmatprep.subr.bf16.mxu0 0
    %285 = vmatpush1.bf16.msra.mxu0 0
    %286 = vmatprep.subr.bf16.mxu0 0
    %287 = vmatpush1.bf16.msra.mxu0 0
    %288 = vmatprep.subr.bf16.mxu0 0
    %289 = vmatpush1.bf16.msra.mxu0 0
    %290 = vmatprep.subr.bf16.mxu0 0
    %291 = vmatpush1.bf16.msra.mxu0 0
    %292 = vmatprep.subr.bf16.mxu0 0
    %293 = vmatpush1.bf16.msra.mxu0 0
    %294 = vmatprep.subr.bf16.mxu0 0
    %295 = vmatpush1.bf16.msra.mxu0 0
    %296 = vmatprep.subr.bf16.mxu0 %v218
    %297 = vmatpush1.bf16.msra.mxu0 %v217
    %298 = vmatprep.subr.bf16.mxu0 %v210
    %299 = vmatpush1.bf16.msra.mxu0 %v209
    %300 = vmatprep.subr.bf16.mxu0 0
    %301 = vmatpush2.bf16.msra.mxu0 0
    %302 = vmatprep.subr.bf16.mxu0 0
    %303 = vmatpush2.bf16.msra.mxu0 0
    %304 = vmatprep.subr.bf16.mxu0 0
    %305 = vmatpush2.bf16.msra.mxu0 0
    %306 = vmatprep.subr.bf16.mxu0 0
    %307 = vmatpush2.bf16.msra.mxu0 0
    %308 = vmatprep.subr.bf16.mxu0 0
    %309 = vmatpush2.bf16.msra.mxu0 0
    %310 = vmatprep.subr.bf16.mxu0 0
    %311 = vmatpush2.bf16.msra.mxu0 0
    %312 = vmatprep.subr.bf16.mxu0 0
    %313 = vmatpush2.bf16.msra.mxu0 0
    %314 = vmatprep.subr.bf16.mxu0 0
    %315 = vmatpush2.bf16.msra.mxu0 0
    %316 = vmatprep.mubr.bf16.mxu0 0
    %317 = vmatmul.mubr.bf16.gmra.mxu0 %v241
    %v318 = vpop.f32.mrf.mxu0
    %v319 = vadd.f32 %v130, %v318
    %v320 = vpop.f32.mrf.mxu0
    %v321 = vadd.f32 %v134, %v320
    %v322 = vpop.f32.mrf.mxu0
    %v323 = vpop.f32.mrf.mxu0
    %324 = vdwg.mxu0
    %325 = vmatprep.subr.bf16.mxu0 0
    %326 = vmatpush1.bf16.msra.mxu0 0
    %327 = vmatprep.subr.bf16.mxu0 0
    %328 = vmatpush1.bf16.msra.mxu0 0
    %329 = vmatprep.subr.bf16.mxu0 0
    %330 = vmatpush1.bf16.msra.mxu0 0
    %331 = vmatprep.subr.bf16.mxu0 0
    %332 = vmatpush1.bf16.msra.mxu0 0
    %333 = vmatprep.subr.bf16.mxu0 0
    %334 = vmatpush1.bf16.msra.mxu0 0
    %335 = vmatprep.subr.bf16.mxu0 0
    %336 = vmatpush1.bf16.msra.mxu0 0
    %337 = vmatprep.subr.bf16.mxu0 %v220
    %338 = vmatpush1.bf16.msra.mxu0 %v219
    %339 = vmatprep.subr.bf16.mxu0 %v212
    %340 = vmatpush1.bf16.msra.mxu0 %v211
    %341 = vmatprep.subr.bf16.mxu0 0
    %342 = vmatpush2.bf16.msra.mxu0 0
    %343 = vmatprep.subr.bf16.mxu0 0
    %344 = vmatpush2.bf16.msra.mxu0 0
    %345 = vmatprep.subr.bf16.mxu0 0
    %346 = vmatpush2.bf16.msra.mxu0 0
    %347 = vmatprep.subr.bf16.mxu0 0
    %348 = vmatpush2.bf16.msra.mxu0 0
    %349 = vmatprep.subr.bf16.mxu0 0
    %350 = vmatpush2.bf16.msra.mxu0 0
    %351 = vmatprep.subr.bf16.mxu0 0
    %352 = vmatpush2.bf16.msra.mxu0 0
    %353 = vmatprep.subr.bf16.mxu0 0
    %354 = vmatpush2.bf16.msra.mxu0 0
    %355 = vmatprep.subr.bf16.mxu0 0
    %356 = vmatpush2.bf16.msra.mxu0 0
    %357 = vmatprep.mubr.bf16.mxu0 0
    %358 = vmatmul.mubr.bf16.gmra.mxu0 %v241
    %v359 = vpop.f32.mrf.mxu0
    %v360 = vadd.f32 %v138, %v359
    %v361 = vpop.f32.mrf.mxu0
    %v362 = vadd.f32 %v142, %v361
    %v363 = vpop.f32.mrf.mxu0
    %v364 = vpop.f32.mrf.mxu0
    %365 = vdwg.mxu0
    %366 = vmatprep.subr.bf16.mxu0 0
    %367 = vmatpush1.bf16.msra.mxu0 0
    %368 = vmatprep.subr.bf16.mxu0 0
    %369 = vmatpush1.bf16.msra.mxu0 0
    %370 = vmatprep.subr.bf16.mxu0 0
    %371 = vmatpush1.bf16.msra.mxu0 0
    %372 = vmatprep.subr.bf16.mxu0 0
    %373 = vmatpush1.bf16.msra.mxu0 0
    %374 = vmatprep.subr.bf16.mxu0 0
    %375 = vmatpush1.bf16.msra.mxu0 0
    %376 = vmatprep.subr.bf16.mxu0 0
    %377 = vmatpush1.bf16.msra.mxu0 0
    %378 = vmatprep.subr.bf16.mxu0 %v222
    %379 = vmatpush1.bf16.msra.mxu0 %v221
    %380 = vmatprep.subr.bf16.mxu0 %v214
    %381 = vmatpush1.bf16.msra.mxu0 %v213
    %382 = vmatprep.subr.bf16.mxu0 0
    %383 = vmatpush2.bf16.msra.mxu0 0
    %384 = vmatprep.subr.bf16.mxu0 0
    %385 = vmatpush2.bf16.msra.mxu0 0
    %386 = vmatprep.subr.bf16.mxu0 0
    %387 = vmatpush2.bf16.msra.mxu0 0
    %388 = vmatprep.subr.bf16.mxu0 0
    %389 = vmatpush2.bf16.msra.mxu0 0
    %390 = vmatprep.subr.bf16.mxu0 0
    %391 = vmatpush2.bf16.msra.mxu0 0
    %392 = vmatprep.subr.bf16.mxu0 0
    %393 = vmatpush2.bf16.msra.mxu0 0
    %394 = vmatprep.subr.bf16.mxu0 0
    %395 = vmatpush2.bf16.msra.mxu0 0
    %396 = vmatprep.subr.bf16.mxu0 0
    %397 = vmatpush2.bf16.msra.mxu0 0
    %398 = vmatprep.mubr.bf16.mxu0 0
    %399 = vmatmul.mubr.bf16.gmra.mxu0 %v241
    %v400 = vpop.f32.mrf.mxu0
    %v401 = vadd.f32 %v146, %v400
    %v402 = vpop.f32.mrf.mxu0
    %v403 = vadd.f32 %v150, %v402
    %v404 = vpop.f32.mrf.mxu0
    %v405 = vpop.f32.mrf.mxu0
    %406 = vdwg.mxu0
    %v407 = vmax.f32 %v278, 0.0
    %v408 = vmax.f32 %v280, 0.0
    %v409 = vmax.f32 %v319, 0.0
    %v410 = vmax.f32 %v321, 0.0
    %v411 = vmax.f32 %v360, 0.0
    %v412 = vmax.f32 %v362, 0.0
    %v413 = vmax.f32 %v401, 0.0
    %v414 = vmax.f32 %v403, 0.0
    %v415 = vpack.c.bf16 %v407, %v407
    %v416 = vpack.c.bf16 %v408, %v408
    %v417 = vpack.c.bf16 %v409, %v409
    %v418 = vpack.c.bf16 %v410, %v410
    %v419 = vpack.c.bf16 %v411, %v411
    %v420 = vpack.c.bf16 %v412, %v412
    %v421 = vpack.c.bf16 %v413, %v413
    %v422 = vpack.c.bf16 %v414, %v414
    %v423 = vld [vmem:[#allocation9] sm:$0xff]
    %v424 = vld [vmem:[#allocation9 + $0x8] sm:$0xff]
    %v425 = vld [vmem:[#allocation9 + $0x10] sm:$0xff]
    %v426 = vld [vmem:[#allocation9 + $0x18] sm:$0xff]
    %v427 = vld [vmem:[#allocation9 + $0x20] sm:$0xff]
    %v428 = vld [vmem:[#allocation9 + $0x28] sm:$0xff]
    %v429 = vld [vmem:[#allocation9 + $0x30] sm:$0xff]
    %v430 = vld [vmem:[#allocation9 + $0x38] sm:$0xff]
    %v431 = vld [vmem:[#allocation9 + $0x40] sm:$0xff]
    %v432 = vld [vmem:[#allocation9 + $0x48] sm:$0xff]
    %v433 = vld [vmem:[#allocation9 + $0x50] sm:$0xff]
    %v434 = vld [vmem:[#allocation9 + $0x58] sm:$0xff]
    %v435 = vld [vmem:[#allocation9 + $0x60] sm:$0xff]
    %v436 = vld [vmem:[#allocation9 + $0x68] sm:$0xff]
    %v437 = vld [vmem:[#allocation9 + $0x70] sm:$0xff]
    %v438 = vld [vmem:[#allocation9 + $0x78] sm:$0xff]
    %v439 = vld [vmem:[#allocation9 + $0x80] sm:$0xff]
    %v440 = vld [vmem:[#allocation9 + $0x88] sm:$0xff]
    %v441 = vld [vmem:[#allocation9 + $0x90] sm:$0xff]
    %v442 = vld [vmem:[#allocation9 + $0x98] sm:$0xff]
    %v443 = vld [vmem:[#allocation9 + $0xa0] sm:$0xff]
    %v444 = vld [vmem:[#allocation9 + $0xa8] sm:$0xff]
    %v445 = vld [vmem:[#allocation9 + $0xb0] sm:$0xff]
    %v446 = vld [vmem:[#allocation9 + $0xb8] sm:$0xff]
    %v447 = vld [vmem:[#allocation9 + $0xc0] sm:$0xff]
    %v448 = vld [vmem:[#allocation9 + $0xc8] sm:$0xff]
    %v449 = vld [vmem:[#allocation9 + $0xd0] sm:$0xff]
    %v450 = vld [vmem:[#allocation9 + $0xd8] sm:$0xff]
    %v451 = vld [vmem:[#allocation9 + $0xe0] sm:$0xff]
    %v452 = vld [vmem:[#allocation9 + $0xe8] sm:$0xff]
    %v453 = vld [vmem:[#allocation9 + $0xf0] sm:$0xff]
    %v454 = vld [vmem:[#allocation9 + $0xf8] sm:$0xff]
    %v455 = vld [vmem:[#allocation9 + $0x100] sm:$0xff]
    %v456 = vld [vmem:[#allocation9 + $0x108] sm:$0xff]
    %v457 = vld [vmem:[#allocation9 + $0x110] sm:$0xff]
    %v458 = vld [vmem:[#allocation9 + $0x118] sm:$0xff]
    %v459 = vld [vmem:[#allocation9 + $0x120] sm:$0xff]
    %v460 = vld [vmem:[#allocation9 + $0x128] sm:$0xff]
    %v461 = vld [vmem:[#allocation9 + $0x130] sm:$0xff]
    %v462 = vld [vmem:[#allocation9 + $0x138] sm:$0xff]
    %v463 = vld [vmem:[#allocation9 + $0x140] sm:$0xff]
    %v464 = vld [vmem:[#allocation9 + $0x148] sm:$0xff]
    %v465 = vld [vmem:[#allocation9 + $0x150] sm:$0xff]
    %v466 = vld [vmem:[#allocation9 + $0x158] sm:$0xff]
    %v467 = vld [vmem:[#allocation9 + $0x160] sm:$0xff]
    %v468 = vld [vmem:[#allocation9 + $0x168] sm:$0xff]
    %v469 = vld [vmem:[#allocation9 + $0x170] sm:$0xff]
    %v470 = vld [vmem:[#allocation9 + $0x178] sm:$0xff]
    %v471 = vld [vmem:[#allocation9 + $0x180] sm:$0xff]
    %v472 = vld [vmem:[#allocation9 + $0x188] sm:$0xff]
    %v473 = vld [vmem:[#allocation9 + $0x190] sm:$0xff]
    %v474 = vld [vmem:[#allocation9 + $0x198] sm:$0xff]
    %v475 = vld [vmem:[#allocation9 + $0x1a0] sm:$0xff]
    %v476 = vld [vmem:[#allocation9 + $0x1a8] sm:$0xff]
    %v477 = vld [vmem:[#allocation9 + $0x1b0] sm:$0xff]
    %v478 = vld [vmem:[#allocation9 + $0x1b8] sm:$0xff]
    %v479 = vld [vmem:[#allocation9 + $0x1c0] sm:$0xff]
    %v480 = vld [vmem:[#allocation9 + $0x1c8] sm:$0xff]
    %v481 = vld [vmem:[#allocation9 + $0x1d0] sm:$0xff]
    %v482 = vld [vmem:[#allocation9 + $0x1d8] sm:$0xff]
    %v483 = vld [vmem:[#allocation9 + $0x1e0] sm:$0xff]
    %v484 = vld [vmem:[#allocation9 + $0x1e8] sm:$0xff]
    %v485 = vld [vmem:[#allocation9 + $0x1f0] sm:$0xff]
    %v486 = vld [vmem:[#allocation9 + $0x1f8] sm:$0xff]
    %v487 = vld [vmem:[#allocation9 + $0x200] sm:$0xff]
    %v488 = vld [vmem:[#allocation9 + $0x208] sm:$0xff]
    %v489 = vld [vmem:[#allocation9 + $0x210] sm:$0xff]
    %v490 = vld [vmem:[#allocation9 + $0x218] sm:$0xff]
    %v491 = vld [vmem:[#allocation9 + $0x220] sm:$0xff]
    %v492 = vld [vmem:[#allocation9 + $0x228] sm:$0xff]
    %v493 = vld [vmem:[#allocation9 + $0x230] sm:$0xff]
    %v494 = vld [vmem:[#allocation9 + $0x238] sm:$0xff]
    %v495 = vld [vmem:[#allocation9 + $0x240] sm:$0xff]
    %v496 = vld [vmem:[#allocation9 + $0x248] sm:$0xff]
    %v497 = vld [vmem:[#allocation9 + $0x250] sm:$0xff]
    %v498 = vld [vmem:[#allocation9 + $0x258] sm:$0xff]
    %v499 = vld [vmem:[#allocation9 + $0x260] sm:$0xff]
    %v500 = vld [vmem:[#allocation9 + $0x268] sm:$0xff]
    %v501 = vld [vmem:[#allocation9 + $0x270] sm:$0xff]
    %v502 = vld [vmem:[#allocation9 + $0x278] sm:$0xff]
    %v503 = vld [vmem:[#allocation9 + $0x280] sm:$0xff]
    %v504 = vld [vmem:[#allocation9 + $0x288] sm:$0xff]
    %v505 = vld [vmem:[#allocation9 + $0x290] sm:$0xff]
    %v506 = vld [vmem:[#allocation9 + $0x298] sm:$0xff]
    %v507 = vld [vmem:[#allocation9 + $0x2a0] sm:$0xff]
    %v508 = vld [vmem:[#allocation9 + $0x2a8] sm:$0xff]
    %v509 = vld [vmem:[#allocation9 + $0x2b0] sm:$0xff]
    %v510 = vld [vmem:[#allocation9 + $0x2b8] sm:$0xff]
    %v511 = vld [vmem:[#allocation9 + $0x2c0] sm:$0xff]
    %v512 = vld [vmem:[#allocation9 + $0x2c8] sm:$0xff]
    %v513 = vld [vmem:[#allocation9 + $0x2d0] sm:$0xff]
    %v514 = vld [vmem:[#allocation9 + $0x2d8] sm:$0xff]
    %v515 = vld [vmem:[#allocation9 + $0x2e0] sm:$0xff]
    %v516 = vld [vmem:[#allocation9 + $0x2e8] sm:$0xff]
    %v517 = vld [vmem:[#allocation9 + $0x2f0] sm:$0xff]
    %v518 = vld [vmem:[#allocation9 + $0x2f8] sm:$0xff]
    %v519 = vld [vmem:[#allocation9 + $0x300] sm:$0xff]
    %v520 = vld [vmem:[#allocation9 + $0x308] sm:$0xff]
    %v521 = vld [vmem:[#allocation9 + $0x310] sm:$0xff]
    %v522 = vld [vmem:[#allocation9 + $0x318] sm:$0xff]
    %v523 = vld [vmem:[#allocation9 + $0x320] sm:$0xff]
    %v524 = vld [vmem:[#allocation9 + $0x328] sm:$0xff]
    %v525 = vld [vmem:[#allocation9 + $0x330] sm:$0xff]
    %v526 = vld [vmem:[#allocation9 + $0x338] sm:$0xff]
    %v527 = vld [vmem:[#allocation9 + $0x340] sm:$0xff]
    %v528 = vld [vmem:[#allocation9 + $0x348] sm:$0xff]
    %v529 = vld [vmem:[#allocation9 + $0x350] sm:$0xff]
    %v530 = vld [vmem:[#allocation9 + $0x358] sm:$0xff]
    %v531 = vld [vmem:[#allocation9 + $0x360] sm:$0xff]
    %v532 = vld [vmem:[#allocation9 + $0x368] sm:$0xff]
    %v533 = vld [vmem:[#allocation9 + $0x370] sm:$0xff]
    %v534 = vld [vmem:[#allocation9 + $0x378] sm:$0xff]
    %v535 = vld [vmem:[#allocation9 + $0x380] sm:$0xff]
    %v536 = vld [vmem:[#allocation9 + $0x388] sm:$0xff]
    %v537 = vld [vmem:[#allocation9 + $0x390] sm:$0xff]
    %v538 = vld [vmem:[#allocation9 + $0x398] sm:$0xff]
    %v539 = vld [vmem:[#allocation9 + $0x3a0] sm:$0xff]
    %v540 = vld [vmem:[#allocation9 + $0x3a8] sm:$0xff]
    %v541 = vld [vmem:[#allocation9 + $0x3b0] sm:$0xff]
    %v542 = vld [vmem:[#allocation9 + $0x3b8] sm:$0xff]
    %v543 = vld [vmem:[#allocation9 + $0x3c0] sm:$0xff]
    %v544 = vld [vmem:[#allocation9 + $0x3c8] sm:$0xff]
    %v545 = vld [vmem:[#allocation9 + $0x3d0] sm:$0xff]
    %v546 = vld [vmem:[#allocation9 + $0x3d8] sm:$0xff]
    %v547 = vld [vmem:[#allocation9 + $0x3e0] sm:$0xff]
    %v548 = vld [vmem:[#allocation9 + $0x3e8] sm:$0xff]
    %v549 = vld [vmem:[#allocation9 + $0x3f0] sm:$0xff]
    %v550 = vld [vmem:[#allocation9 + $0x3f8] sm:$0xff]
    %v551 = vld [vmem:[#allocation9 + $0x400] sm:$0xff]
    %v552 = vld [vmem:[#allocation9 + $0x408] sm:$0xff]
    %v553 = vld [vmem:[#allocation9 + $0x410] sm:$0xff]
    %v554 = vld [vmem:[#allocation9 + $0x418] sm:$0xff]
    %v555 = vld [vmem:[#allocation9 + $0x420] sm:$0xff]
    %v556 = vld [vmem:[#allocation9 + $0x428] sm:$0xff]
    %v557 = vld [vmem:[#allocation9 + $0x430] sm:$0xff]
    %v558 = vld [vmem:[#allocation9 + $0x438] sm:$0xff]
    %v559 = vld [vmem:[#allocation9 + $0x440] sm:$0xff]
    %v560 = vld [vmem:[#allocation9 + $0x448] sm:$0xff]
    %v561 = vld [vmem:[#allocation9 + $0x450] sm:$0xff]
    %v562 = vld [vmem:[#allocation9 + $0x458] sm:$0xff]
    %v563 = vld [vmem:[#allocation9 + $0x460] sm:$0xff]
    %v564 = vld [vmem:[#allocation9 + $0x468] sm:$0xff]
    %v565 = vld [vmem:[#allocation9 + $0x470] sm:$0xff]
    %v566 = vld [vmem:[#allocation9 + $0x478] sm:$0xff]
    %v567 = vld [vmem:[#allocation9 + $0x480] sm:$0xff]
    %v568 = vld [vmem:[#allocation9 + $0x488] sm:$0xff]
    %v569 = vld [vmem:[#allocation9 + $0x490] sm:$0xff]
    %v570 = vld [vmem:[#allocation9 + $0x498] sm:$0xff]
    %v571 = vld [vmem:[#allocation9 + $0x4a0] sm:$0xff]
    %v572 = vld [vmem:[#allocation9 + $0x4a8] sm:$0xff]
    %v573 = vld [vmem:[#allocation9 + $0x4b0] sm:$0xff]
    %v574 = vld [vmem:[#allocation9 + $0x4b8] sm:$0xff]
    %v575 = vld [vmem:[#allocation9 + $0x4c0] sm:$0xff]
    %v576 = vld [vmem:[#allocation9 + $0x4c8] sm:$0xff]
    %v577 = vld [vmem:[#allocation9 + $0x4d0] sm:$0xff]
    %v578 = vld [vmem:[#allocation9 + $0x4d8] sm:$0xff]
    %v579 = vld [vmem:[#allocation9 + $0x4e0] sm:$0xff]
    %v580 = vld [vmem:[#allocation9 + $0x4e8] sm:$0xff]
    %v581 = vld [vmem:[#allocation9 + $0x4f0] sm:$0xff]
    %v582 = vld [vmem:[#allocation9 + $0x4f8] sm:$0xff]
    %v583 = vld [vmem:[#allocation9 + $0x500] sm:$0xff]
    %v584 = vld [vmem:[#allocation9 + $0x508] sm:$0xff]
    %v585 = vld [vmem:[#allocation9 + $0x510] sm:$0xff]
    %v586 = vld [vmem:[#allocation9 + $0x518] sm:$0xff]
    %v587 = vld [vmem:[#allocation9 + $0x520] sm:$0xff]
    %v588 = vld [vmem:[#allocation9 + $0x528] sm:$0xff]
    %v589 = vld [vmem:[#allocation9 + $0x530] sm:$0xff]
    %v590 = vld [vmem:[#allocation9 + $0x538] sm:$0xff]
    %v591 = vld [vmem:[#allocation9 + $0x540] sm:$0xff]
    %v592 = vld [vmem:[#allocation9 + $0x548] sm:$0xff]
    %v593 = vld [vmem:[#allocation9 + $0x550] sm:$0xff]
    %v594 = vld [vmem:[#allocation9 + $0x558] sm:$0xff]
    %v595 = vld [vmem:[#allocation9 + $0x560] sm:$0xff]
    %v596 = vld [vmem:[#allocation9 + $0x568] sm:$0xff]
    %v597 = vld [vmem:[#allocation9 + $0x570] sm:$0xff]
    %v598 = vld [vmem:[#allocation9 + $0x578] sm:$0xff]
    %v599 = vld [vmem:[#allocation9 + $0x580] sm:$0xff]
    %v600 = vld [vmem:[#allocation9 + $0x588] sm:$0xff]
    %v601 = vld [vmem:[#allocation9 + $0x590] sm:$0xff]
    %v602 = vld [vmem:[#allocation9 + $0x598] sm:$0xff]
    %v603 = vld [vmem:[#allocation9 + $0x5a0] sm:$0xff]
    %v604 = vld [vmem:[#allocation9 + $0x5a8] sm:$0xff]
    %v605 = vld [vmem:[#allocation9 + $0x5b0] sm:$0xff]
    %v606 = vld [vmem:[#allocation9 + $0x5b8] sm:$0xff]
    %v607 = vld [vmem:[#allocation9 + $0x5c0] sm:$0xff]
    %v608 = vld [vmem:[#allocation9 + $0x5c8] sm:$0xff]
    %v609 = vld [vmem:[#allocation9 + $0x5d0] sm:$0xff]
    %v610 = vld [vmem:[#allocation9 + $0x5d8] sm:$0xff]
    %v611 = vld [vmem:[#allocation9 + $0x5e0] sm:$0xff]
    %v612 = vld [vmem:[#allocation9 + $0x5e8] sm:$0xff]
    %v613 = vld [vmem:[#allocation9 + $0x5f0] sm:$0xff]
    %v614 = vld [vmem:[#allocation9 + $0x5f8] sm:$0xff]
    %v615 = vld [vmem:[#allocation9 + $0x600] sm:$0xff]
    %v616 = vld [vmem:[#allocation9 + $0x608] sm:$0xff]
    %v617 = vld [vmem:[#allocation9 + $0x610] sm:$0xff]
    %v618 = vld [vmem:[#allocation9 + $0x618] sm:$0xff]
    %v619 = vld [vmem:[#allocation9 + $0x620] sm:$0xff]
    %v620 = vld [vmem:[#allocation9 + $0x628] sm:$0xff]
    %v621 = vld [vmem:[#allocation9 + $0x630] sm:$0xff]
    %v622 = vld [vmem:[#allocation9 + $0x638] sm:$0xff]
    %v623 = vld [vmem:[#allocation9 + $0x640] sm:$0xff]
    %v624 = vld [vmem:[#allocation9 + $0x648] sm:$0xff]
    %v625 = vld [vmem:[#allocation9 + $0x650] sm:$0xff]
    %v626 = vld [vmem:[#allocation9 + $0x658] sm:$0xff]
    %v627 = vld [vmem:[#allocation9 + $0x660] sm:$0xff]
    %v628 = vld [vmem:[#allocation9 + $0x668] sm:$0xff]
    %v629 = vld [vmem:[#allocation9 + $0x670] sm:$0xff]
    %v630 = vld [vmem:[#allocation9 + $0x678] sm:$0xff]
    %v631 = vld [vmem:[#allocation9 + $0x680] sm:$0xff]
    %v632 = vld [vmem:[#allocation9 + $0x688] sm:$0xff]
    %v633 = vld [vmem:[#allocation9 + $0x690] sm:$0xff]
    %v634 = vld [vmem:[#allocation9 + $0x698] sm:$0xff]
    %v635 = vld [vmem:[#allocation9 + $0x6a0] sm:$0xff]
    %v636 = vld [vmem:[#allocation9 + $0x6a8] sm:$0xff]
    %v637 = vld [vmem:[#allocation9 + $0x6b0] sm:$0xff]
    %v638 = vld [vmem:[#allocation9 + $0x6b8] sm:$0xff]
    %v639 = vld [vmem:[#allocation9 + $0x6c0] sm:$0xff]
    %v640 = vld [vmem:[#allocation9 + $0x6c8] sm:$0xff]
    %v641 = vld [vmem:[#allocation9 + $0x6d0] sm:$0xff]
    %v642 = vld [vmem:[#allocation9 + $0x6d8] sm:$0xff]
    %v643 = vld [vmem:[#allocation9 + $0x6e0] sm:$0xff]
    %v644 = vld [vmem:[#allocation9 + $0x6e8] sm:$0xff]
    %v645 = vld [vmem:[#allocation9 + $0x6f0] sm:$0xff]
    %v646 = vld [vmem:[#allocation9 + $0x6f8] sm:$0xff]
    %v647 = vld [vmem:[#allocation9 + $0x700] sm:$0xff]
    %v648 = vld [vmem:[#allocation9 + $0x708] sm:$0xff]
    %v649 = vld [vmem:[#allocation9 + $0x710] sm:$0xff]
    %v650 = vld [vmem:[#allocation9 + $0x718] sm:$0xff]
    %v651 = vld [vmem:[#allocation9 + $0x720] sm:$0xff]
    %v652 = vld [vmem:[#allocation9 + $0x728] sm:$0xff]
    %v653 = vld [vmem:[#allocation9 + $0x730] sm:$0xff]
    %v654 = vld [vmem:[#allocation9 + $0x738] sm:$0xff]
    %v655 = vld [vmem:[#allocation9 + $0x740] sm:$0xff]
    %v656 = vld [vmem:[#allocation9 + $0x748] sm:$0xff]
    %v657 = vld [vmem:[#allocation9 + $0x750] sm:$0xff]
    %v658 = vld [vmem:[#allocation9 + $0x758] sm:$0xff]
    %v659 = vld [vmem:[#allocation9 + $0x760] sm:$0xff]
    %v660 = vld [vmem:[#allocation9 + $0x768] sm:$0xff]
    %v661 = vld [vmem:[#allocation9 + $0x770] sm:$0xff]
    %v662 = vld [vmem:[#allocation9 + $0x778] sm:$0xff]
    %v663 = vld [vmem:[#allocation9 + $0x780] sm:$0xff]
    %v664 = vld [vmem:[#allocation9 + $0x788] sm:$0xff]
    %v665 = vld [vmem:[#allocation9 + $0x790] sm:$0xff]
    %v666 = vld [vmem:[#allocation9 + $0x798] sm:$0xff]
    %v667 = vld [vmem:[#allocation9 + $0x7a0] sm:$0xff]
    %v668 = vld [vmem:[#allocation9 + $0x7a8] sm:$0xff]
    %v669 = vld [vmem:[#allocation9 + $0x7b0] sm:$0xff]
    %v670 = vld [vmem:[#allocation9 + $0x7b8] sm:$0xff]
    %v671 = vld [vmem:[#allocation9 + $0x7c0] sm:$0xff]
    %v672 = vld [vmem:[#allocation9 + $0x7c8] sm:$0xff]
    %v673 = vld [vmem:[#allocation9 + $0x7d0] sm:$0xff]
    %v674 = vld [vmem:[#allocation9 + $0x7d8] sm:$0xff]
    %v675 = vld [vmem:[#allocation9 + $0x7e0] sm:$0xff]
    %v676 = vld [vmem:[#allocation9 + $0x7e8] sm:$0xff]
    %v677 = vld [vmem:[#allocation9 + $0x7f0] sm:$0xff]
    %v678 = vld [vmem:[#allocation9 + $0x7f8] sm:$0xff]
    %v679 = vld [vmem:[%s4] sm:$0xf]
    %v681 = vlaneseq
    %v682 = vshrl.u32 %v681, 7
    %v683 = vsub.s32 0, %v682
    %v684 = vrot.slane %v679, %v683
    %v685 = vlaneseq
    %v686 = vshrl.u32 %v685, 7
    %v687 = vsub.s32 1, %v686
    %v688 = vrot.slane %v679, %v687
    %v689 = vlaneseq
    %v690 = vshrl.u32 %v689, 7
    %v691 = vsub.s32 2, %v690
    %v692 = vrot.slane %v679, %v691
    %v693 = vlaneseq
    %v694 = vshrl.u32 %v693, 7
    %v695 = vsub.s32 3, %v694
    %v696 = vrot.slane %v679, %v695
    %v957 = vunpack.c.l.b16 %v423
    %v958 = vunpack.c.h.b16 %v423
    %v959 = vunpack.c.l.b16 %v424
    %v960 = vunpack.c.h.b16 %v424
    %v961 = vunpack.c.l.b16 %v425
    %v962 = vunpack.c.h.b16 %v425
    %v963 = vunpack.c.l.b16 %v426
    %v964 = vunpack.c.h.b16 %v426
    %v965 = vunpack.c.l.b16 %v427
    %v966 = vunpack.c.h.b16 %v427
    %v967 = vunpack.c.l.b16 %v428
    %v968 = vunpack.c.h.b16 %v428
    %v969 = vunpack.c.l.b16 %v429
    %v970 = vunpack.c.h.b16 %v429
    %v971 = vunpack.c.l.b16 %v430
    %v972 = vunpack.c.h.b16 %v430
    %v973 = vunpack.c.l.b16 %v431
    %v974 = vunpack.c.h.b16 %v431
    %v975 = vunpack.c.l.b16 %v432
    %v976 = vunpack.c.h.b16 %v432
    %v977 = vunpack.c.l.b16 %v433
    %v978 = vunpack.c.h.b16 %v433
    %v979 = vunpack.c.l.b16 %v434
    %v980 = vunpack.c.h.b16 %v434
    %v981 = vunpack.c.l.b16 %v435
    %v982 = vunpack.c.h.b16 %v435
    %v983 = vunpack.c.l.b16 %v436
    %v984 = vunpack.c.h.b16 %v436
    %v985 = vunpack.c.l.b16 %v437
    %v986 = vunpack.c.h.b16 %v437
    %v987 = vunpack.c.l.b16 %v438
    %v988 = vunpack.c.h.b16 %v438
    %v989 = vunpack.c.l.b16 %v439
    %v990 = vunpack.c.h.b16 %v439
    %v991 = vunpack.c.l.b16 %v440
    %v992 = vunpack.c.h.b16 %v440
    %v993 = vunpack.c.l.b16 %v441
    %v994 = vunpack.c.h.b16 %v441
    %v995 = vunpack.c.l.b16 %v442
    %v996 = vunpack.c.h.b16 %v442
    %v997 = vunpack.c.l.b16 %v443
    %v998 = vunpack.c.h.b16 %v443
    %v999 = vunpack.c.l.b16 %v444
    %v1000 = vunpack.c.h.b16 %v444
    %v1001 = vunpack.c.l.b16 %v445
    %v1002 = vunpack.c.h.b16 %v445
    %v1003 = vunpack.c.l.b16 %v446
    %v1004 = vunpack.c.h.b16 %v446
    %v1005 = vunpack.c.l.b16 %v447
    %v1006 = vunpack.c.h.b16 %v447
    %v1007 = vunpack.c.l.b16 %v448
    %v1008 = vunpack.c.h.b16 %v448
    %v1009 = vunpack.c.l.b16 %v449
    %v1010 = vunpack.c.h.b16 %v449
    %v1011 = vunpack.c.l.b16 %v450
    %v1012 = vunpack.c.h.b16 %v450
    %v1013 = vunpack.c.l.b16 %v451
    %v1014 = vunpack.c.h.b16 %v451
    %v1015 = vunpack.c.l.b16 %v452
    %v1016 = vunpack.c.h.b16 %v452
    %v1017 = vunpack.c.l.b16 %v453
    %v1018 = vunpack.c.h.b16 %v453
    %v1019 = vunpack.c.l.b16 %v454
    %v1020 = vunpack.c.h.b16 %v454
    %v1021 = vunpack.c.l.b16 %v455
    %v1022 = vunpack.c.h.b16 %v455
    %v1023 = vunpack.c.l.b16 %v456
    %v1024 = vunpack.c.h.b16 %v456
    %v1025 = vunpack.c.l.b16 %v457
    %v1026 = vunpack.c.h.b16 %v457
    %v1027 = vunpack.c.l.b16 %v458
    %v1028 = vunpack.c.h.b16 %v458
    %v1029 = vunpack.c.l.b16 %v459
    %v1030 = vunpack.c.h.b16 %v459
    %v1031 = vunpack.c.l.b16 %v460
    %v1032 = vunpack.c.h.b16 %v460
    %v1033 = vunpack.c.l.b16 %v461
    %v1034 = vunpack.c.h.b16 %v461
    %v1035 = vunpack.c.l.b16 %v462
    %v1036 = vunpack.c.h.b16 %v462
    %v1037 = vunpack.c.l.b16 %v463
    %v1038 = vunpack.c.h.b16 %v463
    %v1039 = vunpack.c.l.b16 %v464
    %v1040 = vunpack.c.h.b16 %v464
    %v1041 = vunpack.c.l.b16 %v465
    %v1042 = vunpack.c.h.b16 %v465
    %v1043 = vunpack.c.l.b16 %v466
    %v1044 = vunpack.c.h.b16 %v466
    %v1045 = vunpack.c.l.b16 %v467
    %v1046 = vunpack.c.h.b16 %v467
    %v1047 = vunpack.c.l.b16 %v468
    %v1048 = vunpack.c.h.b16 %v468
    %v1049 = vunpack.c.l.b16 %v469
    %v1050 = vunpack.c.h.b16 %v469
    %v1051 = vunpack.c.l.b16 %v470
    %v1052 = vunpack.c.h.b16 %v470
    %v1053 = vunpack.c.l.b16 %v471
    %v1054 = vunpack.c.h.b16 %v471
    %v1055 = vunpack.c.l.b16 %v472
    %v1056 = vunpack.c.h.b16 %v472
    %v1057 = vunpack.c.l.b16 %v473
    %v1058 = vunpack.c.h.b16 %v473
    %v1059 = vunpack.c.l.b16 %v474
    %v1060 = vunpack.c.h.b16 %v474
    %v1061 = vunpack.c.l.b16 %v475
    %v1062 = vunpack.c.h.b16 %v475
    %v1063 = vunpack.c.l.b16 %v476
    %v1064 = vunpack.c.h.b16 %v476
    %v1065 = vunpack.c.l.b16 %v477
    %v1066 = vunpack.c.h.b16 %v477
    %v1067 = vunpack.c.l.b16 %v478
    %v1068 = vunpack.c.h.b16 %v478
    %v1069 = vunpack.c.l.b16 %v479
    %v1070 = vunpack.c.h.b16 %v479
    %v1071 = vunpack.c.l.b16 %v480
    %v1072 = vunpack.c.h.b16 %v480
    %v1073 = vunpack.c.l.b16 %v481
    %v1074 = vunpack.c.h.b16 %v481
    %v1075 = vunpack.c.l.b16 %v482
    %v1076 = vunpack.c.h.b16 %v482
    %v1077 = vunpack.c.l.b16 %v483
    %v1078 = vunpack.c.h.b16 %v483
    %v1079 = vunpack.c.l.b16 %v484
    %v1080 = vunpack.c.h.b16 %v484
    %v1081 = vunpack.c.l.b16 %v485
    %v1082 = vunpack.c.h.b16 %v485
    %v1083 = vunpack.c.l.b16 %v486
    %v1084 = vunpack.c.h.b16 %v486
    %v1085 = vunpack.c.l.b16 %v487
    %v1086 = vunpack.c.h.b16 %v487
    %v1087 = vunpack.c.l.b16 %v488
    %v1088 = vunpack.c.h.b16 %v488
    %v1089 = vunpack.c.l.b16 %v489
    %v1090 = vunpack.c.h.b16 %v489
    %v1091 = vunpack.c.l.b16 %v490
    %v1092 = vunpack.c.h.b16 %v490
    %v1093 = vunpack.c.l.b16 %v491
    %v1094 = vunpack.c.h.b16 %v491
    %v1095 = vunpack.c.l.b16 %v492
    %v1096 = vunpack.c.h.b16 %v492
    %v1097 = vunpack.c.l.b16 %v493
    %v1098 = vunpack.c.h.b16 %v493
    %v1099 = vunpack.c.l.b16 %v494
    %v1100 = vunpack.c.h.b16 %v494
    %v1101 = vunpack.c.l.b16 %v495
    %v1102 = vunpack.c.h.b16 %v495
    %v1103 = vunpack.c.l.b16 %v496
    %v1104 = vunpack.c.h.b16 %v496
    %v1105 = vunpack.c.l.b16 %v497
    %v1106 = vunpack.c.h.b16 %v497
    %v1107 = vunpack.c.l.b16 %v498
    %v1108 = vunpack.c.h.b16 %v498
    %v1109 = vunpack.c.l.b16 %v499
    %v1110 = vunpack.c.h.b16 %v499
    %v1111 = vunpack.c.l.b16 %v500
    %v1112 = vunpack.c.h.b16 %v500
    %v1113 = vunpack.c.l.b16 %v501
    %v1114 = vunpack.c.h.b16 %v501
    %v1115 = vunpack.c.l.b16 %v502
    %v1116 = vunpack.c.h.b16 %v502
    %v1117 = vunpack.c.l.b16 %v503
    %v1118 = vunpack.c.h.b16 %v503
    %v1119 = vunpack.c.l.b16 %v504
    %v1120 = vunpack.c.h.b16 %v504
    %v1121 = vunpack.c.l.b16 %v505
    %v1122 = vunpack.c.h.b16 %v505
    %v1123 = vunpack.c.l.b16 %v506
    %v1124 = vunpack.c.h.b16 %v506
    %v1125 = vunpack.c.l.b16 %v507
    %v1126 = vunpack.c.h.b16 %v507
    %v1127 = vunpack.c.l.b16 %v508
    %v1128 = vunpack.c.h.b16 %v508
    %v1129 = vunpack.c.l.b16 %v509
    %v1130 = vunpack.c.h.b16 %v509
    %v1131 = vunpack.c.l.b16 %v510
    %v1132 = vunpack.c.h.b16 %v510
    %v1133 = vunpack.c.l.b16 %v511
    %v1134 = vunpack.c.h.b16 %v511
    %v1135 = vunpack.c.l.b16 %v512
    %v1136 = vunpack.c.h.b16 %v512
    %v1137 = vunpack.c.l.b16 %v513
    %v1138 = vunpack.c.h.b16 %v513
    %v1139 = vunpack.c.l.b16 %v514
    %v1140 = vunpack.c.h.b16 %v514
    %v1141 = vunpack.c.l.b16 %v515
    %v1142 = vunpack.c.h.b16 %v515
    %v1143 = vunpack.c.l.b16 %v516
    %v1144 = vunpack.c.h.b16 %v516
    %v1145 = vunpack.c.l.b16 %v517
    %v1146 = vunpack.c.h.b16 %v517
    %v1147 = vunpack.c.l.b16 %v518
    %v1148 = vunpack.c.h.b16 %v518
    %v1149 = vunpack.c.l.b16 %v519
    %v1150 = vunpack.c.h.b16 %v519
    %v1151 = vunpack.c.l.b16 %v520
    %v1152 = vunpack.c.h.b16 %v520
    %v1153 = vunpack.c.l.b16 %v521
    %v1154 = vunpack.c.h.b16 %v521
    %v1155 = vunpack.c.l.b16 %v522
    %v1156 = vunpack.c.h.b16 %v522
    %v1157 = vunpack.c.l.b16 %v523
    %v1158 = vunpack.c.h.b16 %v523
    %v1159 = vunpack.c.l.b16 %v524
    %v1160 = vunpack.c.h.b16 %v524
    %v1161 = vunpack.c.l.b16 %v525
    %v1162 = vunpack.c.h.b16 %v525
    %v1163 = vunpack.c.l.b16 %v526
    %v1164 = vunpack.c.h.b16 %v526
    %v1165 = vunpack.c.l.b16 %v527
    %v1166 = vunpack.c.h.b16 %v527
    %v1167 = vunpack.c.l.b16 %v528
    %v1168 = vunpack.c.h.b16 %v528
    %v1169 = vunpack.c.l.b16 %v529
    %v1170 = vunpack.c.h.b16 %v529
    %v1171 = vunpack.c.l.b16 %v530
    %v1172 = vunpack.c.h.b16 %v530
    %v1173 = vunpack.c.l.b16 %v531
    %v1174 = vunpack.c.h.b16 %v531
    %v1175 = vunpack.c.l.b16 %v532
    %v1176 = vunpack.c.h.b16 %v532
    %v1177 = vunpack.c.l.b16 %v533
    %v1178 = vunpack.c.h.b16 %v533
    %v1179 = vunpack.c.l.b16 %v534
    %v1180 = vunpack.c.h.b16 %v534
    %v1181 = vunpack.c.l.b16 %v535
    %v1182 = vunpack.c.h.b16 %v535
    %v1183 = vunpack.c.l.b16 %v536
    %v1184 = vunpack.c.h.b16 %v536
    %v1185 = vunpack.c.l.b16 %v537
    %v1186 = vunpack.c.h.b16 %v537
    %v1187 = vunpack.c.l.b16 %v538
    %v1188 = vunpack.c.h.b16 %v538
    %v1189 = vunpack.c.l.b16 %v539
    %v1190 = vunpack.c.h.b16 %v539
    %v1191 = vunpack.c.l.b16 %v540
    %v1192 = vunpack.c.h.b16 %v540
    %v1193 = vunpack.c.l.b16 %v541
    %v1194 = vunpack.c.h.b16 %v541
    %v1195 = vunpack.c.l.b16 %v542
    %v1196 = vunpack.c.h.b16 %v542
    %v1197 = vunpack.c.l.b16 %v543
    %v1198 = vunpack.c.h.b16 %v543
    %v1199 = vunpack.c.l.b16 %v544
    %v1200 = vunpack.c.h.b16 %v544
    %v1201 = vunpack.c.l.b16 %v545
    %v1202 = vunpack.c.h.b16 %v545
    %v1203 = vunpack.c.l.b16 %v546
    %v1204 = vunpack.c.h.b16 %v546
    %v1205 = vunpack.c.l.b16 %v547
    %v1206 = vunpack.c.h.b16 %v547
    %v1207 = vunpack.c.l.b16 %v548
    %v1208 = vunpack.c.h.b16 %v548
    %v1209 = vunpack.c.l.b16 %v549
    %v1210 = vunpack.c.h.b16 %v549
    %v1211 = vunpack.c.l.b16 %v550
    %v1212 = vunpack.c.h.b16 %v550
    %v1213 = vunpack.c.l.b16 %v551
    %v1214 = vunpack.c.h.b16 %v551
    %v1215 = vunpack.c.l.b16 %v552
    %v1216 = vunpack.c.h.b16 %v552
    %v1217 = vunpack.c.l.b16 %v553
    %v1218 = vunpack.c.h.b16 %v553
    %v1219 = vunpack.c.l.b16 %v554
    %v1220 = vunpack.c.h.b16 %v554
    %v1221 = vunpack.c.l.b16 %v555
    %v1222 = vunpack.c.h.b16 %v555
    %v1223 = vunpack.c.l.b16 %v556
    %v1224 = vunpack.c.h.b16 %v556
    %v1225 = vunpack.c.l.b16 %v557
    %v1226 = vunpack.c.h.b16 %v557
    %v1227 = vunpack.c.l.b16 %v558
    %v1228 = vunpack.c.h.b16 %v558
    %v1229 = vunpack.c.l.b16 %v559
    %v1230 = vunpack.c.h.b16 %v559
    %v1231 = vunpack.c.l.b16 %v560
    %v1232 = vunpack.c.h.b16 %v560
    %v1233 = vunpack.c.l.b16 %v561
    %v1234 = vunpack.c.h.b16 %v561
    %v1235 = vunpack.c.l.b16 %v562
    %v1236 = vunpack.c.h.b16 %v562
    %v1237 = vunpack.c.l.b16 %v563
    %v1238 = vunpack.c.h.b16 %v563
    %v1239 = vunpack.c.l.b16 %v564
    %v1240 = vunpack.c.h.b16 %v564
    %v1241 = vunpack.c.l.b16 %v565
    %v1242 = vunpack.c.h.b16 %v565
    %v1243 = vunpack.c.l.b16 %v566
    %v1244 = vunpack.c.h.b16 %v566
    %v1245 = vunpack.c.l.b16 %v567
    %v1246 = vunpack.c.h.b16 %v567
    %v1247 = vunpack.c.l.b16 %v568
    %v1248 = vunpack.c.h.b16 %v568
    %v1249 = vunpack.c.l.b16 %v569
    %v1250 = vunpack.c.h.b16 %v569
    %v1251 = vunpack.c.l.b16 %v570
    %v1252 = vunpack.c.h.b16 %v570
    %v1253 = vunpack.c.l.b16 %v571
    %v1254 = vunpack.c.h.b16 %v571
    %v1255 = vunpack.c.l.b16 %v572
    %v1256 = vunpack.c.h.b16 %v572
    %v1257 = vunpack.c.l.b16 %v573
    %v1258 = vunpack.c.h.b16 %v573
    %v1259 = vunpack.c.l.b16 %v574
    %v1260 = vunpack.c.h.b16 %v574
    %v1261 = vunpack.c.l.b16 %v575
    %v1262 = vunpack.c.h.b16 %v575
    %v1263 = vunpack.c.l.b16 %v576
    %v1264 = vunpack.c.h.b16 %v576
    %v1265 = vunpack.c.l.b16 %v577
    %v1266 = vunpack.c.h.b16 %v577
    %v1267 = vunpack.c.l.b16 %v578
    %v1268 = vunpack.c.h.b16 %v578
    %v1269 = vunpack.c.l.b16 %v579
    %v1270 = vunpack.c.h.b16 %v579
    %v1271 = vunpack.c.l.b16 %v580
    %v1272 = vunpack.c.h.b16 %v580
    %v1273 = vunpack.c.l.b16 %v581
    %v1274 = vunpack.c.h.b16 %v581
    %v1275 = vunpack.c.l.b16 %v582
    %v1276 = vunpack.c.h.b16 %v582
    %v1277 = vunpack.c.l.b16 %v583
    %v1278 = vunpack.c.h.b16 %v583
    %v1279 = vunpack.c.l.b16 %v584
    %v1280 = vunpack.c.h.b16 %v584
    %v1281 = vunpack.c.l.b16 %v585
    %v1282 = vunpack.c.h.b16 %v585
    %v1283 = vunpack.c.l.b16 %v586
    %v1284 = vunpack.c.h.b16 %v586
    %v1285 = vunpack.c.l.b16 %v587
    %v1286 = vunpack.c.h.b16 %v587
    %v1287 = vunpack.c.l.b16 %v588
    %v1288 = vunpack.c.h.b16 %v588
    %v1289 = vunpack.c.l.b16 %v589
    %v1290 = vunpack.c.h.b16 %v589
    %v1291 = vunpack.c.l.b16 %v590
    %v1292 = vunpack.c.h.b16 %v590
    %v1293 = vunpack.c.l.b16 %v591
    %v1294 = vunpack.c.h.b16 %v591
    %v1295 = vunpack.c.l.b16 %v592
    %v1296 = vunpack.c.h.b16 %v592
    %v1297 = vunpack.c.l.b16 %v593
    %v1298 = vunpack.c.h.b16 %v593
    %v1299 = vunpack.c.l.b16 %v594
    %v1300 = vunpack.c.h.b16 %v594
    %v1301 = vunpack.c.l.b16 %v595
    %v1302 = vunpack.c.h.b16 %v595
    %v1303 = vunpack.c.l.b16 %v596
    %v1304 = vunpack.c.h.b16 %v596
    %v1305 = vunpack.c.l.b16 %v597
    %v1306 = vunpack.c.h.b16 %v597
    %v1307 = vunpack.c.l.b16 %v598
    %v1308 = vunpack.c.h.b16 %v598
    %v1309 = vunpack.c.l.b16 %v599
    %v1310 = vunpack.c.h.b16 %v599
    %v1311 = vunpack.c.l.b16 %v600
    %v1312 = vunpack.c.h.b16 %v600
    %v1313 = vunpack.c.l.b16 %v601
    %v1314 = vunpack.c.h.b16 %v601
    %v1315 = vunpack.c.l.b16 %v602
    %v1316 = vunpack.c.h.b16 %v602
    %v1317 = vunpack.c.l.b16 %v603
    %v1318 = vunpack.c.h.b16 %v603
    %v1319 = vunpack.c.l.b16 %v604
    %v1320 = vunpack.c.h.b16 %v604
    %v1321 = vunpack.c.l.b16 %v605
    %v1322 = vunpack.c.h.b16 %v605
    %v1323 = vunpack.c.l.b16 %v606
    %v1324 = vunpack.c.h.b16 %v606
    %v1325 = vunpack.c.l.b16 %v607
    %v1326 = vunpack.c.h.b16 %v607
    %v1327 = vunpack.c.l.b16 %v608
    %v1328 = vunpack.c.h.b16 %v608
    %v1329 = vunpack.c.l.b16 %v609
    %v1330 = vunpack.c.h.b16 %v609
    %v1331 = vunpack.c.l.b16 %v610
    %v1332 = vunpack.c.h.b16 %v610
    %v1333 = vunpack.c.l.b16 %v611
    %v1334 = vunpack.c.h.b16 %v611
    %v1335 = vunpack.c.l.b16 %v612
    %v1336 = vunpack.c.h.b16 %v612
    %v1337 = vunpack.c.l.b16 %v613
    %v1338 = vunpack.c.h.b16 %v613
    %v1339 = vunpack.c.l.b16 %v614
    %v1340 = vunpack.c.h.b16 %v614
    %v1341 = vunpack.c.l.b16 %v615
    %v1342 = vunpack.c.h.b16 %v615
    %v1343 = vunpack.c.l.b16 %v616
    %v1344 = vunpack.c.h.b16 %v616
    %v1345 = vunpack.c.l.b16 %v617
    %v1346 = vunpack.c.h.b16 %v617
    %v1347 = vunpack.c.l.b16 %v618
    %v1348 = vunpack.c.h.b16 %v618
    %v1349 = vunpack.c.l.b16 %v619
    %v1350 = vunpack.c.h.b16 %v619
    %v1351 = vunpack.c.l.b16 %v620
    %v1352 = vunpack.c.h.b16 %v620
    %v1353 = vunpack.c.l.b16 %v621
    %v1354 = vunpack.c.h.b16 %v621
    %v1355 = vunpack.c.l.b16 %v622
    %v1356 = vunpack.c.h.b16 %v622
    %v1357 = vunpack.c.l.b16 %v623
    %v1358 = vunpack.c.h.b16 %v623
    %v1359 = vunpack.c.l.b16 %v624
    %v1360 = vunpack.c.h.b16 %v624
    %v1361 = vunpack.c.l.b16 %v625
    %v1362 = vunpack.c.h.b16 %v625
    %v1363 = vunpack.c.l.b16 %v626
    %v1364 = vunpack.c.h.b16 %v626
    %v1365 = vunpack.c.l.b16 %v627
    %v1366 = vunpack.c.h.b16 %v627
    %v1367 = vunpack.c.l.b16 %v628
    %v1368 = vunpack.c.h.b16 %v628
    %v1369 = vunpack.c.l.b16 %v629
    %v1370 = vunpack.c.h.b16 %v629
    %v1371 = vunpack.c.l.b16 %v630
    %v1372 = vunpack.c.h.b16 %v630
    %v1373 = vunpack.c.l.b16 %v631
    %v1374 = vunpack.c.h.b16 %v631
    %v1375 = vunpack.c.l.b16 %v632
    %v1376 = vunpack.c.h.b16 %v632
    %v1377 = vunpack.c.l.b16 %v633
    %v1378 = vunpack.c.h.b16 %v633
    %v1379 = vunpack.c.l.b16 %v634
    %v1380 = vunpack.c.h.b16 %v634
    %v1381 = vunpack.c.l.b16 %v635
    %v1382 = vunpack.c.h.b16 %v635
    %v1383 = vunpack.c.l.b16 %v636
    %v1384 = vunpack.c.h.b16 %v636
    %v1385 = vunpack.c.l.b16 %v637
    %v1386 = vunpack.c.h.b16 %v637
    %v1387 = vunpack.c.l.b16 %v638
    %v1388 = vunpack.c.h.b16 %v638
    %v1389 = vunpack.c.l.b16 %v639
    %v1390 = vunpack.c.h.b16 %v639
    %v1391 = vunpack.c.l.b16 %v640
    %v1392 = vunpack.c.h.b16 %v640
    %v1393 = vunpack.c.l.b16 %v641
    %v1394 = vunpack.c.h.b16 %v641
    %v1395 = vunpack.c.l.b16 %v642
    %v1396 = vunpack.c.h.b16 %v642
    %v1397 = vunpack.c.l.b16 %v643
    %v1398 = vunpack.c.h.b16 %v643
    %v1399 = vunpack.c.l.b16 %v644
    %v1400 = vunpack.c.h.b16 %v644
    %v1401 = vunpack.c.l.b16 %v645
    %v1402 = vunpack.c.h.b16 %v645
    %v1403 = vunpack.c.l.b16 %v646
    %v1404 = vunpack.c.h.b16 %v646
    %v1405 = vunpack.c.l.b16 %v647
    %v1406 = vunpack.c.h.b16 %v647
    %v1407 = vunpack.c.l.b16 %v648
    %v1408 = vunpack.c.h.b16 %v648
    %v1409 = vunpack.c.l.b16 %v649
    %v1410 = vunpack.c.h.b16 %v649
    %v1411 = vunpack.c.l.b16 %v650
    %v1412 = vunpack.c.h.b16 %v650
    %v1413 = vunpack.c.l.b16 %v651
    %v1414 = vunpack.c.h.b16 %v651
    %v1415 = vunpack.c.l.b16 %v652
    %v1416 = vunpack.c.h.b16 %v652
    %v1417 = vunpack.c.l.b16 %v653
    %v1418 = vunpack.c.h.b16 %v653
    %v1419 = vunpack.c.l.b16 %v654
    %v1420 = vunpack.c.h.b16 %v654
    %v1421 = vunpack.c.l.b16 %v655
    %v1422 = vunpack.c.h.b16 %v655
    %v1423 = vunpack.c.l.b16 %v656
    %v1424 = vunpack.c.h.b16 %v656
    %v1425 = vunpack.c.l.b16 %v657
    %v1426 = vunpack.c.h.b16 %v657
    %v1427 = vunpack.c.l.b16 %v658
    %v1428 = vunpack.c.h.b16 %v658
    %v1429 = vunpack.c.l.b16 %v659
    %v1430 = vunpack.c.h.b16 %v659
    %v1431 = vunpack.c.l.b16 %v660
    %v1432 = vunpack.c.h.b16 %v660
    %v1433 = vunpack.c.l.b16 %v661
    %v1434 = vunpack.c.h.b16 %v661
    %v1435 = vunpack.c.l.b16 %v662
    %v1436 = vunpack.c.h.b16 %v662
    %v1437 = vunpack.c.l.b16 %v663
    %v1438 = vunpack.c.h.b16 %v663
    %v1439 = vunpack.c.l.b16 %v664
    %v1440 = vunpack.c.h.b16 %v664
    %v1441 = vunpack.c.l.b16 %v665
    %v1442 = vunpack.c.h.b16 %v665
    %v1443 = vunpack.c.l.b16 %v666
    %v1444 = vunpack.c.h.b16 %v666
    %v1445 = vunpack.c.l.b16 %v667
    %v1446 = vunpack.c.h.b16 %v667
    %v1447 = vunpack.c.l.b16 %v668
    %v1448 = vunpack.c.h.b16 %v668
    %v1449 = vunpack.c.l.b16 %v669
    %v1450 = vunpack.c.h.b16 %v669
    %v1451 = vunpack.c.l.b16 %v670
    %v1452 = vunpack.c.h.b16 %v670
    %v1453 = vunpack.c.l.b16 %v671
    %v1454 = vunpack.c.h.b16 %v671
    %v1455 = vunpack.c.l.b16 %v672
    %v1456 = vunpack.c.h.b16 %v672
    %v1457 = vunpack.c.l.b16 %v673
    %v1458 = vunpack.c.h.b16 %v673
    %v1459 = vunpack.c.l.b16 %v674
    %v1460 = vunpack.c.h.b16 %v674
    %v1461 = vunpack.c.l.b16 %v675
    %v1462 = vunpack.c.h.b16 %v675
    %v1463 = vunpack.c.l.b16 %v676
    %v1464 = vunpack.c.h.b16 %v676
    %v1465 = vunpack.c.l.b16 %v677
    %v1466 = vunpack.c.h.b16 %v677
    %v1467 = vunpack.c.l.b16 %v678
    %v1468 = vunpack.c.h.b16 %v678
    %v1469 = vpack.c.b16 %v961, %v957
    %v1470 = vpack.c.b16 %v962, %v958
    %v1471 = vpack.c.b16 %v963, %v959
    %v1472 = vpack.c.b16 %v964, %v960
    %v1473 = vpack.c.b16 %v969, %v965
    %v1474 = vpack.c.b16 %v970, %v966
    %v1475 = vpack.c.b16 %v971, %v967
    %v1476 = vpack.c.b16 %v972, %v968
    %v1477 = vpack.c.b16 %v977, %v973
    %v1478 = vpack.c.b16 %v978, %v974
    %v1479 = vpack.c.b16 %v979, %v975
    %v1480 = vpack.c.b16 %v980, %v976
    %v1481 = vpack.c.b16 %v985, %v981
    %v1482 = vpack.c.b16 %v986, %v982
    %v1483 = vpack.c.b16 %v987, %v983
    %v1484 = vpack.c.b16 %v988, %v984
    %v1485 = vpack.c.b16 %v993, %v989
    %v1486 = vpack.c.b16 %v994, %v990
    %v1487 = vpack.c.b16 %v995, %v991
    %v1488 = vpack.c.b16 %v996, %v992
    %v1489 = vpack.c.b16 %v1001, %v997
    %v1490 = vpack.c.b16 %v1002, %v998
    %v1491 = vpack.c.b16 %v1003, %v999
    %v1492 = vpack.c.b16 %v1004, %v1000
    %v1493 = vpack.c.b16 %v1009, %v1005
    %v1494 = vpack.c.b16 %v1010, %v1006
    %v1495 = vpack.c.b16 %v1011, %v1007
    %v1496 = vpack.c.b16 %v1012, %v1008
    %v1497 = vpack.c.b16 %v1017, %v1013
    %v1498 = vpack.c.b16 %v1018, %v1014
    %v1499 = vpack.c.b16 %v1019, %v1015
    %v1500 = vpack.c.b16 %v1020, %v1016
    %v1501 = vpack.c.b16 %v1025, %v1021
    %v1502 = vpack.c.b16 %v1026, %v1022
    %v1503 = vpack.c.b16 %v1027, %v1023
    %v1504 = vpack.c.b16 %v1028, %v1024
    %v1505 = vpack.c.b16 %v1033, %v1029
    %v1506 = vpack.c.b16 %v1034, %v1030
    %v1507 = vpack.c.b16 %v1035, %v1031
    %v1508 = vpack.c.b16 %v1036, %v1032
    %v1509 = vpack.c.b16 %v1041, %v1037
    %v1510 = vpack.c.b16 %v1042, %v1038
    %v1511 = vpack.c.b16 %v1043, %v1039
    %v1512 = vpack.c.b16 %v1044, %v1040
    %v1513 = vpack.c.b16 %v1049, %v1045
    %v1514 = vpack.c.b16 %v1050, %v1046
    %v1515 = vpack.c.b16 %v1051, %v1047
    %v1516 = vpack.c.b16 %v1052, %v1048
    %v1517 = vpack.c.b16 %v1057, %v1053
    %v1518 = vpack.c.b16 %v1058, %v1054
    %v1519 = vpack.c.b16 %v1059, %v1055
    %v1520 = vpack.c.b16 %v1060, %v1056
    %v1521 = vpack.c.b16 %v1065, %v1061
    %v1522 = vpack.c.b16 %v1066, %v1062
    %v1523 = vpack.c.b16 %v1067, %v1063
    %v1524 = vpack.c.b16 %v1068, %v1064
    %v1525 = vpack.c.b16 %v1073, %v1069
    %v1526 = vpack.c.b16 %v1074, %v1070
    %v1527 = vpack.c.b16 %v1075, %v1071
    %v1528 = vpack.c.b16 %v1076, %v1072
    %v1529 = vpack.c.b16 %v1081, %v1077
    %v1530 = vpack.c.b16 %v1082, %v1078
    %v1531 = vpack.c.b16 %v1083, %v1079
    %v1532 = vpack.c.b16 %v1084, %v1080
    %v1533 = vpack.c.b16 %v1089, %v1085
    %v1534 = vpack.c.b16 %v1090, %v1086
    %v1535 = vpack.c.b16 %v1091, %v1087
    %v1536 = vpack.c.b16 %v1092, %v1088
    %v1537 = vpack.c.b16 %v1097, %v1093
    %v1538 = vpack.c.b16 %v1098, %v1094
    %v1539 = vpack.c.b16 %v1099, %v1095
    %v1540 = vpack.c.b16 %v1100, %v1096
    %v1541 = vpack.c.b16 %v1105, %v1101
    %v1542 = vpack.c.b16 %v1106, %v1102
    %v1543 = vpack.c.b16 %v1107, %v1103
    %v1544 = vpack.c.b16 %v1108, %v1104
    %v1545 = vpack.c.b16 %v1113, %v1109
    %v1546 = vpack.c.b16 %v1114, %v1110
    %v1547 = vpack.c.b16 %v1115, %v1111
    %v1548 = vpack.c.b16 %v1116, %v1112
    %v1549 = vpack.c.b16 %v1121, %v1117
    %v1550 = vpack.c.b16 %v1122, %v1118
    %v1551 = vpack.c.b16 %v1123, %v1119
    %v1552 = vpack.c.b16 %v1124, %v1120
    %v1553 = vpack.c.b16 %v1129, %v1125
    %v1554 = vpack.c.b16 %v1130, %v1126
    %v1555 = vpack.c.b16 %v1131, %v1127
    %v1556 = vpack.c.b16 %v1132, %v1128
    %v1557 = vpack.c.b16 %v1137, %v1133
    %v1558 = vpack.c.b16 %v1138, %v1134
    %v1559 = vpack.c.b16 %v1139, %v1135
    %v1560 = vpack.c.b16 %v1140, %v1136
    %v1561 = vpack.c.b16 %v1145, %v1141
    %v1562 = vpack.c.b16 %v1146, %v1142
    %v1563 = vpack.c.b16 %v1147, %v1143
    %v1564 = vpack.c.b16 %v1148, %v1144
    %v1565 = vpack.c.b16 %v1153, %v1149
    %v1566 = vpack.c.b16 %v1154, %v1150
    %v1567 = vpack.c.b16 %v1155, %v1151
    %v1568 = vpack.c.b16 %v1156, %v1152
    %v1569 = vpack.c.b16 %v1161, %v1157
    %v1570 = vpack.c.b16 %v1162, %v1158
    %v1571 = vpack.c.b16 %v1163, %v1159
    %v1572 = vpack.c.b16 %v1164, %v1160
    %v1573 = vpack.c.b16 %v1169, %v1165
    %v1574 = vpack.c.b16 %v1170, %v1166
    %v1575 = vpack.c.b16 %v1171, %v1167
    %v1576 = vpack.c.b16 %v1172, %v1168
    %v1577 = vpack.c.b16 %v1177, %v1173
    %v1578 = vpack.c.b16 %v1178, %v1174
    %v1579 = vpack.c.b16 %v1179, %v1175
    %v1580 = vpack.c.b16 %v1180, %v1176
    %v1581 = vpack.c.b16 %v1185, %v1181
    %v1582 = vpack.c.b16 %v1186, %v1182
    %v1583 = vpack.c.b16 %v1187, %v1183
    %v1584 = vpack.c.b16 %v1188, %v1184
    %v1585 = vpack.c.b16 %v1193, %v1189
    %v1586 = vpack.c.b16 %v1194, %v1190
    %v1587 = vpack.c.b16 %v1195, %v1191
    %v1588 = vpack.c.b16 %v1196, %v1192
    %v1589 = vpack.c.b16 %v1201, %v1197
    %v1590 = vpack.c.b16 %v1202, %v1198
    %v1591 = vpack.c.b16 %v1203, %v1199
    %v1592 = vpack.c.b16 %v1204, %v1200
    %v1593 = vpack.c.b16 %v1209, %v1205
    %v1594 = vpack.c.b16 %v1210, %v1206
    %v1595 = vpack.c.b16 %v1211, %v1207
    %v1596 = vpack.c.b16 %v1212, %v1208
    %v1597 = vpack.c.b16 %v1217, %v1213
    %v1598 = vpack.c.b16 %v1218, %v1214
    %v1599 = vpack.c.b16 %v1219, %v1215
    %v1600 = vpack.c.b16 %v1220, %v1216
    %v1601 = vpack.c.b16 %v1225, %v1221
    %v1602 = vpack.c.b16 %v1226, %v1222
    %v1603 = vpack.c.b16 %v1227, %v1223
    %v1604 = vpack.c.b16 %v1228, %v1224
    %v1605 = vpack.c.b16 %v1233, %v1229
    %v1606 = vpack.c.b16 %v1234, %v1230
    %v1607 = vpack.c.b16 %v1235, %v1231
    %v1608 = vpack.c.b16 %v1236, %v1232
    %v1609 = vpack.c.b16 %v1241, %v1237
    %v1610 = vpack.c.b16 %v1242, %v1238
    %v1611 = vpack.c.b16 %v1243, %v1239
    %v1612 = vpack.c.b16 %v1244, %v1240
    %v1613 = vpack.c.b16 %v1249, %v1245
    %v1614 = vpack.c.b16 %v1250, %v1246
    %v1615 = vpack.c.b16 %v1251, %v1247
    %v1616 = vpack.c.b16 %v1252, %v1248
    %v1617 = vpack.c.b16 %v1257, %v1253
    %v1618 = vpack.c.b16 %v1258, %v1254
    %v1619 = vpack.c.b16 %v1259, %v1255
    %v1620 = vpack.c.b16 %v1260, %v1256
    %v1621 = vpack.c.b16 %v1265, %v1261
    %v1622 = vpack.c.b16 %v1266, %v1262
    %v1623 = vpack.c.b16 %v1267, %v1263
    %v1624 = vpack.c.b16 %v1268, %v1264
    %v1625 = vpack.c.b16 %v1273, %v1269
    %v1626 = vpack.c.b16 %v1274, %v1270
    %v1627 = vpack.c.b16 %v1275, %v1271
    %v1628 = vpack.c.b16 %v1276, %v1272
    %v1629 = vpack.c.b16 %v1281, %v1277
    %v1630 = vpack.c.b16 %v1282, %v1278
    %v1631 = vpack.c.b16 %v1283, %v1279
    %v1632 = vpack.c.b16 %v1284, %v1280
    %v1633 = vpack.c.b16 %v1289, %v1285
    %v1634 = vpack.c.b16 %v1290, %v1286
    %v1635 = vpack.c.b16 %v1291, %v1287
    %v1636 = vpack.c.b16 %v1292, %v1288
    %v1637 = vpack.c.b16 %v1297, %v1293
    %v1638 = vpack.c.b16 %v1298, %v1294
    %v1639 = vpack.c.b16 %v1299, %v1295
    %v1640 = vpack.c.b16 %v1300, %v1296
    %v1641 = vpack.c.b16 %v1305, %v1301
    %v1642 = vpack.c.b16 %v1306, %v1302
    %v1643 = vpack.c.b16 %v1307, %v1303
    %v1644 = vpack.c.b16 %v1308, %v1304
    %v1645 = vpack.c.b16 %v1313, %v1309
    %v1646 = vpack.c.b16 %v1314, %v1310
    %v1647 = vpack.c.b16 %v1315, %v1311
    %v1648 = vpack.c.b16 %v1316, %v1312
    %v1649 = vpack.c.b16 %v1321, %v1317
    %v1650 = vpack.c.b16 %v1322, %v1318
    %v1651 = vpack.c.b16 %v1323, %v1319
    %v1652 = vpack.c.b16 %v1324, %v1320
    %v1653 = vpack.c.b16 %v1329, %v1325
    %v1654 = vpack.c.b16 %v1330, %v1326
    %v1655 = vpack.c.b16 %v1331, %v1327
    %v1656 = vpack.c.b16 %v1332, %v1328
    %v1657 = vpack.c.b16 %v1337, %v1333
    %v1658 = vpack.c.b16 %v1338, %v1334
    %v1659 = vpack.c.b16 %v1339, %v1335
    %v1660 = vpack.c.b16 %v1340, %v1336
    %v1661 = vpack.c.b16 %v1345, %v1341
    %v1662 = vpack.c.b16 %v1346, %v1342
    %v1663 = vpack.c.b16 %v1347, %v1343
    %v1664 = vpack.c.b16 %v1348, %v1344
    %v1665 = vpack.c.b16 %v1353, %v1349
    %v1666 = vpack.c.b16 %v1354, %v1350
    %v1667 = vpack.c.b16 %v1355, %v1351
    %v1668 = vpack.c.b16 %v1356, %v1352
    %v1669 = vpack.c.b16 %v1361, %v1357
    %v1670 = vpack.c.b16 %v1362, %v1358
    %v1671 = vpack.c.b16 %v1363, %v1359
    %v1672 = vpack.c.b16 %v1364, %v1360
    %v1673 = vpack.c.b16 %v1369, %v1365
    %v1674 = vpack.c.b16 %v1370, %v1366
    %v1675 = vpack.c.b16 %v1371, %v1367
    %v1676 = vpack.c.b16 %v1372, %v1368
    %v1677 = vpack.c.b16 %v1377, %v1373
    %v1678 = vpack.c.b16 %v1378, %v1374
    %v1679 = vpack.c.b16 %v1379, %v1375
    %v1680 = vpack.c.b16 %v1380, %v1376
    %v1681 = vpack.c.b16 %v1385, %v1381
    %v1682 = vpack.c.b16 %v1386, %v1382
    %v1683 = vpack.c.b16 %v1387, %v1383
    %v1684 = vpack.c.b16 %v1388, %v1384
    %v1685 = vpack.c.b16 %v1393, %v1389
    %v1686 = vpack.c.b16 %v1394, %v1390
    %v1687 = vpack.c.b16 %v1395, %v1391
    %v1688 = vpack.c.b16 %v1396, %v1392
    %v1689 = vpack.c.b16 %v1401, %v1397
    %v1690 = vpack.c.b16 %v1402, %v1398
    %v1691 = vpack.c.b16 %v1403, %v1399
    %v1692 = vpack.c.b16 %v1404, %v1400
    %v1693 = vpack.c.b16 %v1409, %v1405
    %v1694 = vpack.c.b16 %v1410, %v1406
    %v1695 = vpack.c.b16 %v1411, %v1407
    %v1696 = vpack.c.b16 %v1412, %v1408
    %v1697 = vpack.c.b16 %v1417, %v1413
    %v1698 = vpack.c.b16 %v1418, %v1414
    %v1699 = vpack.c.b16 %v1419, %v1415
    %v1700 = vpack.c.b16 %v1420, %v1416
    %v1701 = vpack.c.b16 %v1425, %v1421
    %v1702 = vpack.c.b16 %v1426, %v1422
    %v1703 = vpack.c.b16 %v1427, %v1423
    %v1704 = vpack.c.b16 %v1428, %v1424
    %v1705 = vpack.c.b16 %v1433, %v1429
    %v1706 = vpack.c.b16 %v1434, %v1430
    %v1707 = vpack.c.b16 %v1435, %v1431
    %v1708 = vpack.c.b16 %v1436, %v1432
    %v1709 = vpack.c.b16 %v1441, %v1437
    %v1710 = vpack.c.b16 %v1442, %v1438
    %v1711 = vpack.c.b16 %v1443, %v1439
    %v1712 = vpack.c.b16 %v1444, %v1440
    %v1713 = vpack.c.b16 %v1449, %v1445
    %v1714 = vpack.c.b16 %v1450, %v1446
    %v1715 = vpack.c.b16 %v1451, %v1447
    %v1716 = vpack.c.b16 %v1452, %v1448
    %v1717 = vpack.c.b16 %v1457, %v1453
    %v1718 = vpack.c.b16 %v1458, %v1454
    %v1719 = vpack.c.b16 %v1459, %v1455
    %v1720 = vpack.c.b16 %v1460, %v1456
    %v1721 = vpack.c.b16 %v1465, %v1461
    %v1722 = vpack.c.b16 %v1466, %v1462
    %v1723 = vpack.c.b16 %v1467, %v1463
    %v1724 = vpack.c.b16 %v1468, %v1464
    %1981 = vmatprep.subr.bf16.mxu0 %v1498
    %1982 = vmatpush1.bf16.msra.mxu0 %v1497
    %1983 = vmatprep.subr.bf16.mxu0 %v1494
    %1984 = vmatpush1.bf16.msra.mxu0 %v1493
    %1985 = vmatprep.subr.bf16.mxu0 %v1490
    %1986 = vmatpush1.bf16.msra.mxu0 %v1489
    %1987 = vmatprep.subr.bf16.mxu0 %v1486
    %1988 = vmatpush1.bf16.msra.mxu0 %v1485
    %1989 = vmatprep.subr.bf16.mxu0 %v1482
    %1990 = vmatpush1.bf16.msra.mxu0 %v1481
    %1991 = vmatprep.subr.bf16.mxu0 %v1478
    %1992 = vmatpush1.bf16.msra.mxu0 %v1477
    %1993 = vmatprep.subr.bf16.mxu0 %v1474
    %1994 = vmatpush1.bf16.msra.mxu0 %v1473
    %1995 = vmatprep.subr.bf16.mxu0 %v1470
    %1996 = vmatpush1.bf16.msra.mxu0 %v1469
    %1997 = vmatprep.subr.bf16.mxu0 %v1530
    %1998 = vmatpush2.bf16.msra.mxu0 %v1529
    %1999 = vmatprep.subr.bf16.mxu0 %v1526
    %2000 = vmatpush2.bf16.msra.mxu0 %v1525
    %2001 = vmatprep.subr.bf16.mxu0 %v1522
    %2002 = vmatpush2.bf16.msra.mxu0 %v1521
    %2003 = vmatprep.subr.bf16.mxu0 %v1518
    %2004 = vmatpush2.bf16.msra.mxu0 %v1517
    %2005 = vmatprep.subr.bf16.mxu0 %v1514
    %2006 = vmatpush2.bf16.msra.mxu0 %v1513
    %2007 = vmatprep.subr.bf16.mxu0 %v1510
    %2008 = vmatpush2.bf16.msra.mxu0 %v1509
    %2009 = vmatprep.subr.bf16.mxu0 %v1506
    %2010 = vmatpush2.bf16.msra.mxu0 %v1505
    %2011 = vmatprep.subr.bf16.mxu0 %v1502
    %2012 = vmatpush2.bf16.msra.mxu0 %v1501
    %2013 = vmatprep.mubr.bf16.mxu0 %v416
    %2014 = vmatmul.mubr.bf16.gmra.mxu0 %v415
    %v2015 = vpop.f32.mrf.mxu0
    %v2016 = vadd.f32 %v684, %v2015
    %v2017 = vpop.f32.mrf.mxu0
    %v2018 = vadd.f32 %v688, %v2017
    %v2019 = vpop.f32.mrf.mxu0
    %v2020 = vpop.f32.mrf.mxu0
    %2021 = vdwg.mxu0
    %2022 = vmatprep.subr.bf16.mxu0 %v1562
    %2023 = vmatpush1.bf16.msra.mxu0 %v1561
    %2024 = vmatprep.subr.bf16.mxu0 %v1558
    %2025 = vmatpush1.bf16.msra.mxu0 %v1557
    %2026 = vmatprep.subr.bf16.mxu0 %v1554
    %2027 = vmatpush1.bf16.msra.mxu0 %v1553
    %2028 = vmatprep.subr.bf16.mxu0 %v1550
    %2029 = vmatpush1.bf16.msra.mxu0 %v1549
    %2030 = vmatprep.subr.bf16.mxu0 %v1546
    %2031 = vmatpush1.bf16.msra.mxu0 %v1545
    %2032 = vmatprep.subr.bf16.mxu0 %v1542
    %2033 = vmatpush1.bf16.msra.mxu0 %v1541
    %2034 = vmatprep.subr.bf16.mxu0 %v1538
    %2035 = vmatpush1.bf16.msra.mxu0 %v1537
    %2036 = vmatprep.subr.bf16.mxu0 %v1534
    %2037 = vmatpush1.bf16.msra.mxu0 %v1533
    %2038 = vmatprep.subr.bf16.mxu0 %v1594
    %2039 = vmatpush2.bf16.msra.mxu0 %v1593
    %2040 = vmatprep.subr.bf16.mxu0 %v1590
    %2041 = vmatpush2.bf16.msra.mxu0 %v1589
    %2042 = vmatprep.subr.bf16.mxu0 %v1586
    %2043 = vmatpush2.bf16.msra.mxu0 %v1585
    %2044 = vmatprep.subr.bf16.mxu0 %v1582
    %2045 = vmatpush2.bf16.msra.mxu0 %v1581
    %2046 = vmatprep.subr.bf16.mxu0 %v1578
    %2047 = vmatpush2.bf16.msra.mxu0 %v1577
    %2048 = vmatprep.subr.bf16.mxu0 %v1574
    %2049 = vmatpush2.bf16.msra.mxu0 %v1573
    %2050 = vmatprep.subr.bf16.mxu0 %v1570
    %2051 = vmatpush2.bf16.msra.mxu0 %v1569
    %2052 = vmatprep.subr.bf16.mxu0 %v1566
    %2053 = vmatpush2.bf16.msra.mxu0 %v1565
    %2054 = vmatprep.mubr.bf16.mxu0 %v418
    %2055 = vmatmul.mubr.bf16.gmra.mxu0 %v417
    %v2056 = vpop.f32.mrf.mxu0
    %v2057 = vadd.f32 %v2016, %v2056
    %v2058 = vpop.f32.mrf.mxu0
    %v2059 = vadd.f32 %v2018, %v2058
    %v2060 = vpop.f32.mrf.mxu0
    %v2061 = vpop.f32.mrf.mxu0
    %2062 = vdwg.mxu0
    %2063 = vmatprep.subr.bf16.mxu0 %v1626
    %2064 = vmatpush1.bf16.msra.mxu0 %v1625
    %2065 = vmatprep.subr.bf16.mxu0 %v1622
    %2066 = vmatpush1.bf16.msra.mxu0 %v1621
    %2067 = vmatprep.subr.bf16.mxu0 %v1618
    %2068 = vmatpush1.bf16.msra.mxu0 %v1617
    %2069 = vmatprep.subr.bf16.mxu0 %v1614
    %2070 = vmatpush1.bf16.msra.mxu0 %v1613
    %2071 = vmatprep.subr.bf16.mxu0 %v1610
    %2072 = vmatpush1.bf16.msra.mxu0 %v1609
    %2073 = vmatprep.subr.bf16.mxu0 %v1606
    %2074 = vmatpush1.bf16.msra.mxu0 %v1605
    %2075 = vmatprep.subr.bf16.mxu0 %v1602
    %2076 = vmatpush1.bf16.msra.mxu0 %v1601
    %2077 = vmatprep.subr.bf16.mxu0 %v1598
    %2078 = vmatpush1.bf16.msra.mxu0 %v1597
    %2079 = vmatprep.subr.bf16.mxu0 %v1658
    %2080 = vmatpush2.bf16.msra.mxu0 %v1657
    %2081 = vmatprep.subr.bf16.mxu0 %v1654
    %2082 = vmatpush2.bf16.msra.mxu0 %v1653
    %2083 = vmatprep.subr.bf16.mxu0 %v1650
    %2084 = vmatpush2.bf16.msra.mxu0 %v1649
    %2085 = vmatprep.subr.bf16.mxu0 %v1646
    %2086 = vmatpush2.bf16.msra.mxu0 %v1645
    %2087 = vmatprep.subr.bf16.mxu0 %v1642
    %2088 = vmatpush2.bf16.msra.mxu0 %v1641
    %2089 = vmatprep.subr.bf16.mxu0 %v1638
    %2090 = vmatpush2.bf16.msra.mxu0 %v1637
    %2091 = vmatprep.subr.bf16.mxu0 %v1634
    %2092 = vmatpush2.bf16.msra.mxu0 %v1633
    %2093 = vmatprep.subr.bf16.mxu0 %v1630
    %2094 = vmatpush2.bf16.msra.mxu0 %v1629
    %2095 = vmatprep.mubr.bf16.mxu0 %v420
    %2096 = vmatmul.mubr.bf16.gmra.mxu0 %v419
    %v2097 = vpop.f32.mrf.mxu0
    %v2098 = vadd.f32 %v2057, %v2097
    %v2099 = vpop.f32.mrf.mxu0
    %v2100 = vadd.f32 %v2059, %v2099
    %v2101 = vpop.f32.mrf.mxu0
    %v2102 = vpop.f32.mrf.mxu0
    %2103 = vdwg.mxu0
    %2104 = vmatprep.subr.bf16.mxu0 %v1690
    %2105 = vmatpush1.bf16.msra.mxu0 %v1689
    %2106 = vmatprep.subr.bf16.mxu0 %v1686
    %2107 = vmatpush1.bf16.msra.mxu0 %v1685
    %2108 = vmatprep.subr.bf16.mxu0 %v1682
    %2109 = vmatpush1.bf16.msra.mxu0 %v1681
    %2110 = vmatprep.subr.bf16.mxu0 %v1678
    %2111 = vmatpush1.bf16.msra.mxu0 %v1677
    %2112 = vmatprep.subr.bf16.mxu0 %v1674
    %2113 = vmatpush1.bf16.msra.mxu0 %v1673
    %2114 = vmatprep.subr.bf16.mxu0 %v1670
    %2115 = vmatpush1.bf16.msra.mxu0 %v1669
    %2116 = vmatprep.subr.bf16.mxu0 %v1666
    %2117 = vmatpush1.bf16.msra.mxu0 %v1665
    %2118 = vmatprep.subr.bf16.mxu0 %v1662
    %2119 = vmatpush1.bf16.msra.mxu0 %v1661
    %2120 = vmatprep.subr.bf16.mxu0 %v1722
    %2121 = vmatpush2.bf16.msra.mxu0 %v1721
    %2122 = vmatprep.subr.bf16.mxu0 %v1718
    %2123 = vmatpush2.bf16.msra.mxu0 %v1717
    %2124 = vmatprep.subr.bf16.mxu0 %v1714
    %2125 = vmatpush2.bf16.msra.mxu0 %v1713
    %2126 = vmatprep.subr.bf16.mxu0 %v1710
    %2127 = vmatpush2.bf16.msra.mxu0 %v1709
    %2128 = vmatprep.subr.bf16.mxu0 %v1706
    %2129 = vmatpush2.bf16.msra.mxu0 %v1705
    %2130 = vmatprep.subr.bf16.mxu0 %v1702
    %2131 = vmatpush2.bf16.msra.mxu0 %v1701
    %2132 = vmatprep.subr.bf16.mxu0 %v1698
    %2133 = vmatpush2.bf16.msra.mxu0 %v1697
    %2134 = vmatprep.subr.bf16.mxu0 %v1694
    %2135 = vmatpush2.bf16.msra.mxu0 %v1693
    %2136 = vmatprep.mubr.bf16.mxu0 %v422
    %2137 = vmatmul.mubr.bf16.gmra.mxu0 %v421
    %v2138 = vpop.f32.mrf.mxu0
    %v2139 = vadd.f32 %v2098, %v2138
    %v2140 = vpop.f32.mrf.mxu0
    %v2141 = vadd.f32 %v2100, %v2140
    %v2142 = vpop.f32.mrf.mxu0
    %v2143 = vpop.f32.mrf.mxu0
    %2144 = vdwg.mxu0
    %2145 = vmatprep.subr.bf16.mxu0 %v1500
    %2146 = vmatpush1.bf16.msra.mxu0 %v1499
    %2147 = vmatprep.subr.bf16.mxu0 %v1496
    %2148 = vmatpush1.bf16.msra.mxu0 %v1495
    %2149 = vmatprep.subr.bf16.mxu0 %v1492
    %2150 = vmatpush1.bf16.msra.mxu0 %v1491
    %2151 = vmatprep.subr.bf16.mxu0 %v1488
    %2152 = vmatpush1.bf16.msra.mxu0 %v1487
    %2153 = vmatprep.subr.bf16.mxu0 %v1484
    %2154 = vmatpush1.bf16.msra.mxu0 %v1483
    %2155 = vmatprep.subr.bf16.mxu0 %v1480
    %2156 = vmatpush1.bf16.msra.mxu0 %v1479
    %2157 = vmatprep.subr.bf16.mxu0 %v1476
    %2158 = vmatpush1.bf16.msra.mxu0 %v1475
    %2159 = vmatprep.subr.bf16.mxu0 %v1472
    %2160 = vmatpush1.bf16.msra.mxu0 %v1471
    %2161 = vmatprep.subr.bf16.mxu0 %v1532
    %2162 = vmatpush2.bf16.msra.mxu0 %v1531
    %2163 = vmatprep.subr.bf16.mxu0 %v1528
    %2164 = vmatpush2.bf16.msra.mxu0 %v1527
    %2165 = vmatprep.subr.bf16.mxu0 %v1524
    %2166 = vmatpush2.bf16.msra.mxu0 %v1523
    %2167 = vmatprep.subr.bf16.mxu0 %v1520
    %2168 = vmatpush2.bf16.msra.mxu0 %v1519
    %2169 = vmatprep.subr.bf16.mxu0 %v1516
    %2170 = vmatpush2.bf16.msra.mxu0 %v1515
    %2171 = vmatprep.subr.bf16.mxu0 %v1512
    %2172 = vmatpush2.bf16.msra.mxu0 %v1511
    %2173 = vmatprep.subr.bf16.mxu0 %v1508
    %2174 = vmatpush2.bf16.msra.mxu0 %v1507
    %2175 = vmatprep.subr.bf16.mxu0 %v1504
    %2176 = vmatpush2.bf16.msra.mxu0 %v1503
    %2177 = vmatprep.mubr.bf16.mxu0 %v416
    %2178 = vmatmul.mubr.bf16.gmra.mxu0 %v415
    %v2179 = vpop.f32.mrf.mxu0
    %v2180 = vadd.f32 %v692, %v2179
    %v2181 = vpop.f32.mrf.mxu0
    %v2182 = vadd.f32 %v696, %v2181
    %v2183 = vpop.f32.mrf.mxu0
    %v2184 = vpop.f32.mrf.mxu0
    %2185 = vdwg.mxu0
    %2186 = vmatprep.subr.bf16.mxu0 %v1564
    %2187 = vmatpush1.bf16.msra.mxu0 %v1563
    %2188 = vmatprep.subr.bf16.mxu0 %v1560
    %2189 = vmatpush1.bf16.msra.mxu0 %v1559
    %2190 = vmatprep.subr.bf16.mxu0 %v1556
    %2191 = vmatpush1.bf16.msra.mxu0 %v1555
    %2192 = vmatprep.subr.bf16.mxu0 %v1552
    %2193 = vmatpush1.bf16.msra.mxu0 %v1551
    %2194 = vmatprep.subr.bf16.mxu0 %v1548
    %2195 = vmatpush1.bf16.msra.mxu0 %v1547
    %2196 = vmatprep.subr.bf16.mxu0 %v1544
    %2197 = vmatpush1.bf16.msra.mxu0 %v1543
    %2198 = vmatprep.subr.bf16.mxu0 %v1540
    %2199 = vmatpush1.bf16.msra.mxu0 %v1539
    %2200 = vmatprep.subr.bf16.mxu0 %v1536
    %2201 = vmatpush1.bf16.msra.mxu0 %v1535
    %2202 = vmatprep.subr.bf16.mxu0 %v1596
    %2203 = vmatpush2.bf16.msra.mxu0 %v1595
    %2204 = vmatprep.subr.bf16.mxu0 %v1592
    %2205 = vmatpush2.bf16.msra.mxu0 %v1591
    %2206 = vmatprep.subr.bf16.mxu0 %v1588
    %2207 = vmatpush2.bf16.msra.mxu0 %v1587
    %2208 = vmatprep.subr.bf16.mxu0 %v1584
    %2209 = vmatpush2.bf16.msra.mxu0 %v1583
    %2210 = vmatprep.subr.bf16.mxu0 %v1580
    %2211 = vmatpush2.bf16.msra.mxu0 %v1579
    %2212 = vmatprep.subr.bf16.mxu0 %v1576
    %2213 = vmatpush2.bf16.msra.mxu0 %v1575
    %2214 = vmatprep.subr.bf16.mxu0 %v1572
    %2215 = vmatpush2.bf16.msra.mxu0 %v1571
    %2216 = vmatprep.subr.bf16.mxu0 %v1568
    %2217 = vmatpush2.bf16.msra.mxu0 %v1567
    %2218 = vmatprep.mubr.bf16.mxu0 %v418
    %2219 = vmatmul.mubr.bf16.gmra.mxu0 %v417
    %v2220 = vpop.f32.mrf.mxu0
    %v2221 = vadd.f32 %v2180, %v2220
    %v2222 = vpop.f32.mrf.mxu0
    %v2223 = vadd.f32 %v2182, %v2222
    %v2224 = vpop.f32.mrf.mxu0
    %v2225 = vpop.f32.mrf.mxu0
    %2226 = vdwg.mxu0
    %2227 = vmatprep.subr.bf16.mxu0 %v1628
    %2228 = vmatpush1.bf16.msra.mxu0 %v1627
    %2229 = vmatprep.subr.bf16.mxu0 %v1624
    %2230 = vmatpush1.bf16.msra.mxu0 %v1623
    %2231 = vmatprep.subr.bf16.mxu0 %v1620
    %2232 = vmatpush1.bf16.msra.mxu0 %v1619
    %2233 = vmatprep.subr.bf16.mxu0 %v1616
    %2234 = vmatpush1.bf16.msra.mxu0 %v1615
    %2235 = vmatprep.subr.bf16.mxu0 %v1612
    %2236 = vmatpush1.bf16.msra.mxu0 %v1611
    %2237 = vmatprep.subr.bf16.mxu0 %v1608
    %2238 = vmatpush1.bf16.msra.mxu0 %v1607
    %2239 = vmatprep.subr.bf16.mxu0 %v1604
    %2240 = vmatpush1.bf16.msra.mxu0 %v1603
    %2241 = vmatprep.subr.bf16.mxu0 %v1600
    %2242 = vmatpush1.bf16.msra.mxu0 %v1599
    %2243 = vmatprep.subr.bf16.mxu0 %v1660
    %2244 = vmatpush2.bf16.msra.mxu0 %v1659
    %2245 = vmatprep.subr.bf16.mxu0 %v1656
    %2246 = vmatpush2.bf16.msra.mxu0 %v1655
    %2247 = vmatprep.subr.bf16.mxu0 %v1652
    %2248 = vmatpush2.bf16.msra.mxu0 %v1651
    %2249 = vmatprep.subr.bf16.mxu0 %v1648
    %2250 = vmatpush2.bf16.msra.mxu0 %v1647
    %2251 = vmatprep.subr.bf16.mxu0 %v1644
    %2252 = vmatpush2.bf16.msra.mxu0 %v1643
    %2253 = vmatprep.subr.bf16.mxu0 %v1640
    %2254 = vmatpush2.bf16.msra.mxu0 %v1639
    %2255 = vmatprep.subr.bf16.mxu0 %v1636
    %2256 = vmatpush2.bf16.msra.mxu0 %v1635
    %2257 = vmatprep.subr.bf16.mxu0 %v1632
    %2258 = vmatpush2.bf16.msra.mxu0 %v1631
    %2259 = vmatprep.mubr.bf16.mxu0 %v420
    %2260 = vmatmul.mubr.bf16.gmra.mxu0 %v419
    %v2261 = vpop.f32.mrf.mxu0
    %v2262 = vadd.f32 %v2221, %v2261
    %v2263 = vpop.f32.mrf.mxu0
    %v2264 = vadd.f32 %v2223, %v2263
    %v2265 = vpop.f32.mrf.mxu0
    %v2266 = vpop.f32.mrf.mxu0
    %2267 = vdwg.mxu0
    %2268 = vmatprep.subr.bf16.mxu0 %v1692
    %2269 = vmatpush1.bf16.msra.mxu0 %v1691
    %2270 = vmatprep.subr.bf16.mxu0 %v1688
    %2271 = vmatpush1.bf16.msra.mxu0 %v1687
    %2272 = vmatprep.subr.bf16.mxu0 %v1684
    %2273 = vmatpush1.bf16.msra.mxu0 %v1683
    %2274 = vmatprep.subr.bf16.mxu0 %v1680
    %2275 = vmatpush1.bf16.msra.mxu0 %v1679
    %2276 = vmatprep.subr.bf16.mxu0 %v1676
    %2277 = vmatpush1.bf16.msra.mxu0 %v1675
    %2278 = vmatprep.subr.bf16.mxu0 %v1672
    %2279 = vmatpush1.bf16.msra.mxu0 %v1671
    %2280 = vmatprep.subr.bf16.mxu0 %v1668
    %2281 = vmatpush1.bf16.msra.mxu0 %v1667
    %2282 = vmatprep.subr.bf16.mxu0 %v1664
    %2283 = vmatpush1.bf16.msra.mxu0 %v1663
    %2284 = vmatprep.subr.bf16.mxu0 %v1724
    %2285 = vmatpush2.bf16.msra.mxu0 %v1723
    %2286 = vmatprep.subr.bf16.mxu0 %v1720
    %2287 = vmatpush2.bf16.msra.mxu0 %v1719
    %2288 = vmatprep.subr.bf16.mxu0 %v1716
    %2289 = vmatpush2.bf16.msra.mxu0 %v1715
    %2290 = vmatprep.subr.bf16.mxu0 %v1712
    %2291 = vmatpush2.bf16.msra.mxu0 %v1711
    %2292 = vmatprep.subr.bf16.mxu0 %v1708
    %2293 = vmatpush2.bf16.msra.mxu0 %v1707
    %2294 = vmatprep.subr.bf16.mxu0 %v1704
    %2295 = vmatpush2.bf16.msra.mxu0 %v1703
    %2296 = vmatprep.subr.bf16.mxu0 %v1700
    %2297 = vmatpush2.bf16.msra.mxu0 %v1699
    %2298 = vmatprep.subr.bf16.mxu0 %v1696
    %2299 = vmatpush2.bf16.msra.mxu0 %v1695
    %2300 = vmatprep.mubr.bf16.mxu0 %v422
    %2301 = vmatmul.mubr.bf16.gmra.mxu0 %v421
    %v2302 = vpop.f32.mrf.mxu0
    %v2303 = vadd.f32 %v2262, %v2302
    %v2304 = vpop.f32.mrf.mxu0
    %v2305 = vadd.f32 %v2264, %v2304
    %v2306 = vpop.f32.mrf.mxu0
    %v2307 = vpop.f32.mrf.mxu0
    %2308 = vdwg.mxu0
    %v2309 = vmax.f32 %v2139, 0.0
    %v2310 = vmax.f32 %v2141, 0.0
    %v2311 = vmax.f32 %v2303, 0.0
    %v2312 = vmax.f32 %v2305, 0.0
    %v2313 = vpack.c.bf16 %v2309, %v2309
    %v2314 = vpack.c.bf16 %v2310, %v2310
    %v2315 = vpack.c.bf16 %v2311, %v2311
    %v2316 = vpack.c.bf16 %v2312, %v2312
    %v2317 = vld [vmem:[#allocation11] sm:$0xff]
    %v2318 = vld [vmem:[#allocation11 + $0x8] sm:$0xff]
    %v2319 = vld [vmem:[#allocation11 + $0x10] sm:$0xff]
    %v2320 = vld [vmem:[#allocation11 + $0x18] sm:$0xff]
    %v2321 = vld [vmem:[#allocation11 + $0x20] sm:$0xff]
    %v2322 = vld [vmem:[#allocation11 + $0x28] sm:$0xff]
    %v2323 = vld [vmem:[#allocation11 + $0x30] sm:$0xff]
    %v2324 = vld [vmem:[#allocation11 + $0x38] sm:$0xff]
    %v2325 = vld [vmem:[#allocation11 + $0x40] sm:$0xff]
    %v2326 = vld [vmem:[#allocation11 + $0x48] sm:$0xff]
    %v2327 = vld [vmem:[#allocation11 + $0x50] sm:$0xff]
    %v2328 = vld [vmem:[#allocation11 + $0x58] sm:$0xff]
    %v2329 = vld [vmem:[#allocation11 + $0x60] sm:$0xff]
    %v2330 = vld [vmem:[#allocation11 + $0x68] sm:$0xff]
    %v2331 = vld [vmem:[#allocation11 + $0x70] sm:$0xff]
    %v2332 = vld [vmem:[#allocation11 + $0x78] sm:$0xff]
    %v2333 = vld [vmem:[#allocation11 + $0x80] sm:$0xff]
    %v2334 = vld [vmem:[#allocation11 + $0x88] sm:$0xff]
    %v2335 = vld [vmem:[#allocation11 + $0x90] sm:$0xff]
    %v2336 = vld [vmem:[#allocation11 + $0x98] sm:$0xff]
    %v2337 = vld [vmem:[#allocation11 + $0xa0] sm:$0xff]
    %v2338 = vld [vmem:[#allocation11 + $0xa8] sm:$0xff]
    %v2339 = vld [vmem:[#allocation11 + $0xb0] sm:$0xff]
    %v2340 = vld [vmem:[#allocation11 + $0xb8] sm:$0xff]
    %v2341 = vld [vmem:[#allocation11 + $0xc0] sm:$0xff]
    %v2342 = vld [vmem:[#allocation11 + $0xc8] sm:$0xff]
    %v2343 = vld [vmem:[#allocation11 + $0xd0] sm:$0xff]
    %v2344 = vld [vmem:[#allocation11 + $0xd8] sm:$0xff]
    %v2345 = vld [vmem:[#allocation11 + $0xe0] sm:$0xff]
    %v2346 = vld [vmem:[#allocation11 + $0xe8] sm:$0xff]
    %v2347 = vld [vmem:[#allocation11 + $0xf0] sm:$0xff]
    %v2348 = vld [vmem:[#allocation11 + $0xf8] sm:$0xff]
    %v2349 = vld [vmem:[#allocation11 + $0x100] sm:$0xff]
    %v2350 = vld [vmem:[#allocation11 + $0x108] sm:$0xff]
    %v2351 = vld [vmem:[#allocation11 + $0x110] sm:$0xff]
    %v2352 = vld [vmem:[#allocation11 + $0x118] sm:$0xff]
    %v2353 = vld [vmem:[#allocation11 + $0x120] sm:$0xff]
    %v2354 = vld [vmem:[#allocation11 + $0x128] sm:$0xff]
    %v2355 = vld [vmem:[#allocation11 + $0x130] sm:$0xff]
    %v2356 = vld [vmem:[#allocation11 + $0x138] sm:$0xff]
    %v2357 = vld [vmem:[#allocation11 + $0x140] sm:$0xff]
    %v2358 = vld [vmem:[#allocation11 + $0x148] sm:$0xff]
    %v2359 = vld [vmem:[#allocation11 + $0x150] sm:$0xff]
    %v2360 = vld [vmem:[#allocation11 + $0x158] sm:$0xff]
    %v2361 = vld [vmem:[#allocation11 + $0x160] sm:$0xff]
    %v2362 = vld [vmem:[#allocation11 + $0x168] sm:$0xff]
    %v2363 = vld [vmem:[#allocation11 + $0x170] sm:$0xff]
    %v2364 = vld [vmem:[#allocation11 + $0x178] sm:$0xff]
    %v2365 = vld [vmem:[#allocation11 + $0x180] sm:$0xff]
    %v2366 = vld [vmem:[#allocation11 + $0x188] sm:$0xff]
    %v2367 = vld [vmem:[#allocation11 + $0x190] sm:$0xff]
    %v2368 = vld [vmem:[#allocation11 + $0x198] sm:$0xff]
    %v2369 = vld [vmem:[#allocation11 + $0x1a0] sm:$0xff]
    %v2370 = vld [vmem:[#allocation11 + $0x1a8] sm:$0xff]
    %v2371 = vld [vmem:[#allocation11 + $0x1b0] sm:$0xff]
    %v2372 = vld [vmem:[#allocation11 + $0x1b8] sm:$0xff]
    %v2373 = vld [vmem:[#allocation11 + $0x1c0] sm:$0xff]
    %v2374 = vld [vmem:[#allocation11 + $0x1c8] sm:$0xff]
    %v2375 = vld [vmem:[#allocation11 + $0x1d0] sm:$0xff]
    %v2376 = vld [vmem:[#allocation11 + $0x1d8] sm:$0xff]
    %v2377 = vld [vmem:[#allocation11 + $0x1e0] sm:$0xff]
    %v2378 = vld [vmem:[#allocation11 + $0x1e8] sm:$0xff]
    %v2379 = vld [vmem:[#allocation11 + $0x1f0] sm:$0xff]
    %v2380 = vld [vmem:[#allocation11 + $0x1f8] sm:$0xff]
    %v2381 = vld [vmem:[%s6] sm:$0x3]
    %v2383 = vlaneseq
    %v2384 = vshrl.u32 %v2383, 7
    %v2385 = vsub.s32 0, %v2384
    %v2386 = vrot.slane %v2381, %v2385
    %v2387 = vlaneseq
    %v2388 = vshrl.u32 %v2387, 7
    %v2389 = vsub.s32 1, %v2388
    %v2390 = vrot.slane %v2381, %v2389
    %v2457 = vunpack.c.l.b16 %v2317
    %v2458 = vunpack.c.h.b16 %v2317
    %v2459 = vunpack.c.l.b16 %v2318
    %v2460 = vunpack.c.h.b16 %v2318
    %v2461 = vunpack.c.l.b16 %v2319
    %v2462 = vunpack.c.h.b16 %v2319
    %v2463 = vunpack.c.l.b16 %v2320
    %v2464 = vunpack.c.h.b16 %v2320
    %v2465 = vunpack.c.l.b16 %v2321
    %v2466 = vunpack.c.h.b16 %v2321
    %v2467 = vunpack.c.l.b16 %v2322
    %v2468 = vunpack.c.h.b16 %v2322
    %v2469 = vunpack.c.l.b16 %v2323
    %v2470 = vunpack.c.h.b16 %v2323
    %v2471 = vunpack.c.l.b16 %v2324
    %v2472 = vunpack.c.h.b16 %v2324
    %v2473 = vunpack.c.l.b16 %v2325
    %v2474 = vunpack.c.h.b16 %v2325
    %v2475 = vunpack.c.l.b16 %v2326
    %v2476 = vunpack.c.h.b16 %v2326
    %v2477 = vunpack.c.l.b16 %v2327
    %v2478 = vunpack.c.h.b16 %v2327
    %v2479 = vunpack.c.l.b16 %v2328
    %v2480 = vunpack.c.h.b16 %v2328
    %v2481 = vunpack.c.l.b16 %v2329
    %v2482 = vunpack.c.h.b16 %v2329
    %v2483 = vunpack.c.l.b16 %v2330
    %v2484 = vunpack.c.h.b16 %v2330
    %v2485 = vunpack.c.l.b16 %v2331
    %v2486 = vunpack.c.h.b16 %v2331
    %v2487 = vunpack.c.l.b16 %v2332
    %v2488 = vunpack.c.h.b16 %v2332
    %v2489 = vunpack.c.l.b16 %v2333
    %v2490 = vunpack.c.h.b16 %v2333
    %v2491 = vunpack.c.l.b16 %v2334
    %v2492 = vunpack.c.h.b16 %v2334
    %v2493 = vunpack.c.l.b16 %v2335
    %v2494 = vunpack.c.h.b16 %v2335
    %v2495 = vunpack.c.l.b16 %v2336
    %v2496 = vunpack.c.h.b16 %v2336
    %v2497 = vunpack.c.l.b16 %v2337
    %v2498 = vunpack.c.h.b16 %v2337
    %v2499 = vunpack.c.l.b16 %v2338
    %v2500 = vunpack.c.h.b16 %v2338
    %v2501 = vunpack.c.l.b16 %v2339
    %v2502 = vunpack.c.h.b16 %v2339
    %v2503 = vunpack.c.l.b16 %v2340
    %v2504 = vunpack.c.h.b16 %v2340
    %v2505 = vunpack.c.l.b16 %v2341
    %v2506 = vunpack.c.h.b16 %v2341
    %v2507 = vunpack.c.l.b16 %v2342
    %v2508 = vunpack.c.h.b16 %v2342
    %v2509 = vunpack.c.l.b16 %v2343
    %v2510 = vunpack.c.h.b16 %v2343
    %v2511 = vunpack.c.l.b16 %v2344
    %v2512 = vunpack.c.h.b16 %v2344
    %v2513 = vunpack.c.l.b16 %v2345
    %v2514 = vunpack.c.h.b16 %v2345
    %v2515 = vunpack.c.l.b16 %v2346
    %v2516 = vunpack.c.h.b16 %v2346
    %v2517 = vunpack.c.l.b16 %v2347
    %v2518 = vunpack.c.h.b16 %v2347
    %v2519 = vunpack.c.l.b16 %v2348
    %v2520 = vunpack.c.h.b16 %v2348
    %v2521 = vunpack.c.l.b16 %v2349
    %v2522 = vunpack.c.h.b16 %v2349
    %v2523 = vunpack.c.l.b16 %v2350
    %v2524 = vunpack.c.h.b16 %v2350
    %v2525 = vunpack.c.l.b16 %v2351
    %v2526 = vunpack.c.h.b16 %v2351
    %v2527 = vunpack.c.l.b16 %v2352
    %v2528 = vunpack.c.h.b16 %v2352
    %v2529 = vunpack.c.l.b16 %v2353
    %v2530 = vunpack.c.h.b16 %v2353
    %v2531 = vunpack.c.l.b16 %v2354
    %v2532 = vunpack.c.h.b16 %v2354
    %v2533 = vunpack.c.l.b16 %v2355
    %v2534 = vunpack.c.h.b16 %v2355
    %v2535 = vunpack.c.l.b16 %v2356
    %v2536 = vunpack.c.h.b16 %v2356
    %v2537 = vunpack.c.l.b16 %v2357
    %v2538 = vunpack.c.h.b16 %v2357
    %v2539 = vunpack.c.l.b16 %v2358
    %v2540 = vunpack.c.h.b16 %v2358
    %v2541 = vunpack.c.l.b16 %v2359
    %v2542 = vunpack.c.h.b16 %v2359
    %v2543 = vunpack.c.l.b16 %v2360
    %v2544 = vunpack.c.h.b16 %v2360
    %v2545 = vunpack.c.l.b16 %v2361
    %v2546 = vunpack.c.h.b16 %v2361
    %v2547 = vunpack.c.l.b16 %v2362
    %v2548 = vunpack.c.h.b16 %v2362
    %v2549 = vunpack.c.l.b16 %v2363
    %v2550 = vunpack.c.h.b16 %v2363
    %v2551 = vunpack.c.l.b16 %v2364
    %v2552 = vunpack.c.h.b16 %v2364
    %v2553 = vunpack.c.l.b16 %v2365
    %v2554 = vunpack.c.h.b16 %v2365
    %v2555 = vunpack.c.l.b16 %v2366
    %v2556 = vunpack.c.h.b16 %v2366
    %v2557 = vunpack.c.l.b16 %v2367
    %v2558 = vunpack.c.h.b16 %v2367
    %v2559 = vunpack.c.l.b16 %v2368
    %v2560 = vunpack.c.h.b16 %v2368
    %v2561 = vunpack.c.l.b16 %v2369
    %v2562 = vunpack.c.h.b16 %v2369
    %v2563 = vunpack.c.l.b16 %v2370
    %v2564 = vunpack.c.h.b16 %v2370
    %v2565 = vunpack.c.l.b16 %v2371
    %v2566 = vunpack.c.h.b16 %v2371
    %v2567 = vunpack.c.l.b16 %v2372
    %v2568 = vunpack.c.h.b16 %v2372
    %v2569 = vunpack.c.l.b16 %v2373
    %v2570 = vunpack.c.h.b16 %v2373
    %v2571 = vunpack.c.l.b16 %v2374
    %v2572 = vunpack.c.h.b16 %v2374
    %v2573 = vunpack.c.l.b16 %v2375
    %v2574 = vunpack.c.h.b16 %v2375
    %v2575 = vunpack.c.l.b16 %v2376
    %v2576 = vunpack.c.h.b16 %v2376
    %v2577 = vunpack.c.l.b16 %v2377
    %v2578 = vunpack.c.h.b16 %v2377
    %v2579 = vunpack.c.l.b16 %v2378
    %v2580 = vunpack.c.h.b16 %v2378
    %v2581 = vunpack.c.l.b16 %v2379
    %v2582 = vunpack.c.h.b16 %v2379
    %v2583 = vunpack.c.l.b16 %v2380
    %v2584 = vunpack.c.h.b16 %v2380
    %v2585 = vpack.c.b16 %v2459, %v2457
    %v2586 = vpack.c.b16 %v2460, %v2458
    %v2587 = vpack.c.b16 %v2463, %v2461
    %v2588 = vpack.c.b16 %v2464, %v2462
    %v2589 = vpack.c.b16 %v2467, %v2465
    %v2590 = vpack.c.b16 %v2468, %v2466
    %v2591 = vpack.c.b16 %v2471, %v2469
    %v2592 = vpack.c.b16 %v2472, %v2470
    %v2593 = vpack.c.b16 %v2475, %v2473
    %v2594 = vpack.c.b16 %v2476, %v2474
    %v2595 = vpack.c.b16 %v2479, %v2477
    %v2596 = vpack.c.b16 %v2480, %v2478
    %v2597 = vpack.c.b16 %v2483, %v2481
    %v2598 = vpack.c.b16 %v2484, %v2482
    %v2599 = vpack.c.b16 %v2487, %v2485
    %v2600 = vpack.c.b16 %v2488, %v2486
    %v2601 = vpack.c.b16 %v2491, %v2489
    %v2602 = vpack.c.b16 %v2492, %v2490
    %v2603 = vpack.c.b16 %v2495, %v2493
    %v2604 = vpack.c.b16 %v2496, %v2494
    %v2605 = vpack.c.b16 %v2499, %v2497
    %v2606 = vpack.c.b16 %v2500, %v2498
    %v2607 = vpack.c.b16 %v2503, %v2501
    %v2608 = vpack.c.b16 %v2504, %v2502
    %v2609 = vpack.c.b16 %v2507, %v2505
    %v2610 = vpack.c.b16 %v2508, %v2506
    %v2611 = vpack.c.b16 %v2511, %v2509
    %v2612 = vpack.c.b16 %v2512, %v2510
    %v2613 = vpack.c.b16 %v2515, %v2513
    %v2614 = vpack.c.b16 %v2516, %v2514
    %v2615 = vpack.c.b16 %v2519, %v2517
    %v2616 = vpack.c.b16 %v2520, %v2518
    %v2617 = vpack.c.b16 %v2523, %v2521
    %v2618 = vpack.c.b16 %v2524, %v2522
    %v2619 = vpack.c.b16 %v2527, %v2525
    %v2620 = vpack.c.b16 %v2528, %v2526
    %v2621 = vpack.c.b16 %v2531, %v2529
    %v2622 = vpack.c.b16 %v2532, %v2530
    %v2623 = vpack.c.b16 %v2535, %v2533
    %v2624 = vpack.c.b16 %v2536, %v2534
    %v2625 = vpack.c.b16 %v2539, %v2537
    %v2626 = vpack.c.b16 %v2540, %v2538
    %v2627 = vpack.c.b16 %v2543, %v2541
    %v2628 = vpack.c.b16 %v2544, %v2542
    %v2629 = vpack.c.b16 %v2547, %v2545
    %v2630 = vpack.c.b16 %v2548, %v2546
    %v2631 = vpack.c.b16 %v2551, %v2549
    %v2632 = vpack.c.b16 %v2552, %v2550
    %v2633 = vpack.c.b16 %v2555, %v2553
    %v2634 = vpack.c.b16 %v2556, %v2554
    %v2635 = vpack.c.b16 %v2559, %v2557
    %v2636 = vpack.c.b16 %v2560, %v2558
    %v2637 = vpack.c.b16 %v2563, %v2561
    %v2638 = vpack.c.b16 %v2564, %v2562
    %v2639 = vpack.c.b16 %v2567, %v2565
    %v2640 = vpack.c.b16 %v2568, %v2566
    %v2641 = vpack.c.b16 %v2571, %v2569
    %v2642 = vpack.c.b16 %v2572, %v2570
    %v2643 = vpack.c.b16 %v2575, %v2573
    %v2644 = vpack.c.b16 %v2576, %v2574
    %v2645 = vpack.c.b16 %v2579, %v2577
    %v2646 = vpack.c.b16 %v2580, %v2578
    %v2647 = vpack.c.b16 %v2583, %v2581
    %v2648 = vpack.c.b16 %v2584, %v2582
    %2713 = vmatprep.subr.bf16.mxu0 %v2600
    %2714 = vmatpush1.bf16.msra.mxu0 %v2599
    %2715 = vmatprep.subr.bf16.mxu0 %v2598
    %2716 = vmatpush1.bf16.msra.mxu0 %v2597
    %2717 = vmatprep.subr.bf16.mxu0 %v2596
    %2718 = vmatpush1.bf16.msra.mxu0 %v2595
    %2719 = vmatprep.subr.bf16.mxu0 %v2594
    %2720 = vmatpush1.bf16.msra.mxu0 %v2593
    %2721 = vmatprep.subr.bf16.mxu0 %v2592
    %2722 = vmatpush1.bf16.msra.mxu0 %v2591
    %2723 = vmatprep.subr.bf16.mxu0 %v2590
    %2724 = vmatpush1.bf16.msra.mxu0 %v2589
    %2725 = vmatprep.subr.bf16.mxu0 %v2588
    %2726 = vmatpush1.bf16.msra.mxu0 %v2587
    %2727 = vmatprep.subr.bf16.mxu0 %v2586
    %2728 = vmatpush1.bf16.msra.mxu0 %v2585
    %2729 = vmatprep.subr.bf16.mxu0 %v2616
    %2730 = vmatpush2.bf16.msra.mxu0 %v2615
    %2731 = vmatprep.subr.bf16.mxu0 %v2614
    %2732 = vmatpush2.bf16.msra.mxu0 %v2613
    %2733 = vmatprep.subr.bf16.mxu0 %v2612
    %2734 = vmatpush2.bf16.msra.mxu0 %v2611
    %2735 = vmatprep.subr.bf16.mxu0 %v2610
    %2736 = vmatpush2.bf16.msra.mxu0 %v2609
    %2737 = vmatprep.subr.bf16.mxu0 %v2608
    %2738 = vmatpush2.bf16.msra.mxu0 %v2607
    %2739 = vmatprep.subr.bf16.mxu0 %v2606
    %2740 = vmatpush2.bf16.msra.mxu0 %v2605
    %2741 = vmatprep.subr.bf16.mxu0 %v2604
    %2742 = vmatpush2.bf16.msra.mxu0 %v2603
    %2743 = vmatprep.subr.bf16.mxu0 %v2602
    %2744 = vmatpush2.bf16.msra.mxu0 %v2601
    %2745 = vmatprep.mubr.bf16.mxu0 %v2314
    %2746 = vmatmul.mubr.bf16.gmra.mxu0 %v2313
    %v2747 = vpop.f32.mrf.mxu0
    %v2748 = vadd.f32 %v2386, %v2747
    %v2749 = vpop.f32.mrf.mxu0
    %v2750 = vadd.f32 %v2390, %v2749
    %v2751 = vpop.f32.mrf.mxu0
    %v2752 = vpop.f32.mrf.mxu0
    %2753 = vdwg.mxu0
    %2754 = vmatprep.subr.bf16.mxu0 %v2632
    %2755 = vmatpush1.bf16.msra.mxu0 %v2631
    %2756 = vmatprep.subr.bf16.mxu0 %v2630
    %2757 = vmatpush1.bf16.msra.mxu0 %v2629
    %2758 = vmatprep.subr.bf16.mxu0 %v2628
    %2759 = vmatpush1.bf16.msra.mxu0 %v2627
    %2760 = vmatprep.subr.bf16.mxu0 %v2626
    %2761 = vmatpush1.bf16.msra.mxu0 %v2625
    %2762 = vmatprep.subr.bf16.mxu0 %v2624
    %2763 = vmatpush1.bf16.msra.mxu0 %v2623
    %2764 = vmatprep.subr.bf16.mxu0 %v2622
    %2765 = vmatpush1.bf16.msra.mxu0 %v2621
    %2766 = vmatprep.subr.bf16.mxu0 %v2620
    %2767 = vmatpush1.bf16.msra.mxu0 %v2619
    %2768 = vmatprep.subr.bf16.mxu0 %v2618
    %2769 = vmatpush1.bf16.msra.mxu0 %v2617
    %2770 = vmatprep.subr.bf16.mxu0 %v2648
    %2771 = vmatpush2.bf16.msra.mxu0 %v2647
    %2772 = vmatprep.subr.bf16.mxu0 %v2646
    %2773 = vmatpush2.bf16.msra.mxu0 %v2645
    %2774 = vmatprep.subr.bf16.mxu0 %v2644
    %2775 = vmatpush2.bf16.msra.mxu0 %v2643
    %2776 = vmatprep.subr.bf16.mxu0 %v2642
    %2777 = vmatpush2.bf16.msra.mxu0 %v2641
    %2778 = vmatprep.subr.bf16.mxu0 %v2640
    %2779 = vmatpush2.bf16.msra.mxu0 %v2639
    %2780 = vmatprep.subr.bf16.mxu0 %v2638
    %2781 = vmatpush2.bf16.msra.mxu0 %v2637
    %2782 = vmatprep.subr.bf16.mxu0 %v2636
    %2783 = vmatpush2.bf16.msra.mxu0 %v2635
    %2784 = vmatprep.subr.bf16.mxu0 %v2634
    %2785 = vmatpush2.bf16.msra.mxu0 %v2633
    %2786 = vmatprep.mubr.bf16.mxu0 %v2316
    %2787 = vmatmul.mubr.bf16.gmra.mxu0 %v2315
    %v2788 = vpop.f32.mrf.mxu0
    %v2789 = vadd.f32 %v2748, %v2788
    %v2790 = vpop.f32.mrf.mxu0
    %v2791 = vadd.f32 %v2750, %v2790
    %v2792 = vpop.f32.mrf.mxu0
    %v2793 = vpop.f32.mrf.mxu0
    %2794 = vdwg.mxu0
    %v2795 = vmax.f32 %v2789, 0.0
    %v2796 = vmax.f32 %v2791, 0.0
    %v2797 = vld [vmem:[%s7] sm:$0x3]
    %v2798 = vpack.c.bf16 %v2795, %v2795
    %v2799 = vpack.c.bf16 %v2796, %v2796
    %s2800 = sld [smem:[#allocation2]]
    %v2801 = vstv %s2800
    %v2804 = vunpack.c.l.s4 1966171168
    %v2805 = vunpack.c.0.s8 %v2804
    %v2806 = vlaneseq
    %v2807 = vshrl.u32 %v2806, 7
    %v2808 = vsub.s32 %v2805, %v2807
    %v2809 = vrot.slane %v2797, %v2808
    %v2810 = vcombine.high %v2809, %v2809
    %v2812 = vunpack.c.l.s4 1966171168
    %v2813 = vunpack.c.0.s8 %v2812
    %v2814 = vlaneseq
    %v2815 = vshrl.u32 %v2814, 7
    %v2816 = vsub.s32 %v2813, %v2815
    %v2817 = vrot.slane %v2809, %v2816
    %v2819 = vunpack.c.l.s4 1966171168
    %v2820 = vunpack.c.0.s8 %v2819
    %v2821 = vlaneseq
    %v2822 = vshrl.u32 %v2821, 7
    %v2823 = vsub.s32 %v2820, %v2822
    %v2824 = vrot.slane %v2810, %v2823
    %2827 = vmatprep.subr.bf16.mxu0 0
    %2828 = vmatpush1.bf16.xpose.msra.mxu0 0
    %2829 = vmatprep.subr.bf16.mxu0 0
    %2830 = vmatpush1.bf16.xpose.msra.mxu0 0
    %2831 = vmatprep.subr.bf16.mxu0 0
    %2832 = vmatpush1.bf16.xpose.msra.mxu0 0
    %2833 = vmatprep.subr.bf16.mxu0 0
    %2834 = vmatpush1.bf16.xpose.msra.mxu0 0
    %2835 = vmatprep.subr.bf16.mxu0 0
    %2836 = vmatpush1.bf16.xpose.msra.mxu0 0
    %2837 = vmatprep.subr.bf16.mxu0 0
    %2838 = vmatpush1.bf16.xpose.msra.mxu0 0
    %2839 = vmatprep.subr.bf16.mxu0 0
    %2840 = vmatpush1.bf16.xpose.msra.mxu0 0
    %2841 = vmatprep.subr.bf16.mxu0 %v2799
    %2842 = vmatpush1.bf16.xpose.msra.mxu0 %v2798
    %2843 = vmatprep.subr.bf16.mxu0 0
    %2844 = vmatpush2.bf16.xpose.msra.mxu0 0
    %2845 = vmatprep.subr.bf16.mxu0 0
    %2846 = vmatpush2.bf16.xpose.msra.mxu0 0
    %2847 = vmatprep.subr.bf16.mxu0 0
    %2848 = vmatpush2.bf16.xpose.msra.mxu0 0
    %2849 = vmatprep.subr.bf16.mxu0 0
    %2850 = vmatpush2.bf16.xpose.msra.mxu0 0
    %2851 = vmatprep.subr.bf16.mxu0 0
    %2852 = vmatpush2.bf16.xpose.msra.mxu0 0
    %2853 = vmatprep.subr.bf16.mxu0 0
    %2854 = vmatpush2.bf16.xpose.msra.mxu0 0
    %2855 = vmatprep.subr.bf16.mxu0 0
    %2856 = vmatpush2.bf16.xpose.msra.mxu0 0
    %2857 = vmatprep.subr.bf16.mxu0 0
    %2858 = vmatpush2.bf16.xpose.msra.mxu0 0
    %2859 = vmatprep.mubr.bf16.mxu0 %v2824
    %2860 = vmatmul.mubr.bf16.gmra.mxu0 %v2817
    %v2861 = vpop.f32.mrf.mxu0
    %v2862 = vadd.f32 %v2801, %v2861
    %v2863 = vpop.f32.mrf.mxu0
    %v2864 = vpop.f32.mrf.mxu0
    %v2865 = vpop.f32.mrf.mxu0
    %2866 = vdwg.mxu0
    %v2867 = vxor.u32 %v2862, 2147483648
    %v2868 = vmul.f32 %v2867, 1.442695
    %v2869 = vpow.pop %v2868
    %v2870 = vadd.f32 %v2869, 1.0
    %v2871 = vrcp.pop %v2870
    %v2872 = vmul.f32 1.0, %v2871
    %vm2873 = vcmask 57344
    %2874 = vst.msk [vmem:[#allocation12] sm:$0x1] %vm2873, %v2872
    // Predicated region
    $region58: #{tpu_custom_call.1} parent=1 // pred_check
      _
    $region59: #{tpu_custom_call.1} parent=1 // pred_check_branch
      %2876 = sbr.rel (0) target = $region61
    $region60: #{tpu_custom_call.1} parent=1 // pred_region
      %s2878 = ssub.s32 16, 16
      %2879 = vsyncadd [#allocation5], %s2878
      %s2881 = sshll.u32 [#allocation12], 4
      %s2882 = int_to_ptr.vmem [resolvable:$true] %s2881
      %2884 = dma.vmem_to_hbm [thread:$0]  %s2882, 16, %s9, [#allocation5]
    $region61: #{tpu_custom_call.1} parent=1 // pred_fallthru
      _
    // Predicated region
    $region62: #{tpu_custom_call.1} parent=1 // pred_check
      _
    $region63: #{tpu_custom_call.1} parent=1 // pred_check_branch
      %2886 = sbr.rel (0) target = $region65
    $region64: #{tpu_custom_call.1} parent=1 // pred_region
      %2887 = dma.done [#allocation5], 16
    $region65: #{tpu_custom_call.1} parent=1 // pred_fallthru
      _
    %2888 = vsyncpa [#allocation4], 1
    %2889 = vsyncpa [#allocation7], 1
    %2890 = vsyncpa [#allocation10], 1
    %2891 = vsyncpa [#allocation5], 1

</llo_original>
